<compile_context>
chip_gen: v7x
topology: tpu7x:2x2x1
jax: 0.10.0
libtpu: 0.0.40
codegen_flags: <defaults>
</compile_context>

<pallas_src>
import jax
import jax.numpy as jnp
from jax.experimental import pallas as pl
from jax.experimental.pallas import tpu as pltpu


# ----------------------------------------------------------------------------
# Fused Pallas kernel:   out = (x @ Wf) @ Wp + bp_eff      (bf folded into bp)
#   One grid axis over M (tokens).  Both bf16 weight matrices stay resident in
#   VMEM (constant index_map); the (tm, 2C) intermediate lives in a bf16 VMEM
#   scratch, so there is no HBM round-trip between the two matmuls.
# ----------------------------------------------------------------------------
def _fused_f_proj_kernel(x_ref, wf_ref, wp_ref, bp_ref, o_ref, mid_ref):
    # f (its bias was folded into bp_ref by the wrapper):
    # (tm, C)bf16 @ (C, 2C)bf16 -> f32 MXU accumulation -> bf16 VMEM scratch.
    mid_ref[...] = jnp.dot(
        x_ref[...].astype(jnp.bfloat16),
        wf_ref[...],
        preferred_element_type=jnp.float32,
    ).astype(mid_ref.dtype)
    # TODO(synk): real Attention / ShiftViTBlock would act on the two C-wide
    # halves of mid_ref here (and the bf->bp bias fold in the wrapper must be
    # undone); their definitions are unavailable -> identity placeholders.
    # proj: (tm, 2C)bf16 @ (2C, C)bf16 + (1, C)f32 -> (tm, C).
    o_ref[...] = (
        jnp.dot(mid_ref[...], wp_ref[...], preferred_element_type=jnp.float32)
        + bp_ref[...]
    ).astype(o_ref.dtype)


def _token_splits():
    """How many ways to split the token axis.

    2 on chips with two schedulable compute partitions per chip (v7x's two
    TensorCores, v4/v5p megacore); 1 on the single-TensorCore inference chips
    (v5e / v6e), where extra grid steps only add ~0.35 us of pipeline overhead
    each and buy nothing.
    """
    try:
        kind = jax.devices()[0].device_kind.lower()
    except Exception:
        return 1
    single_tc = ("lite" in kind) or ("v5e" in kind) or ("v6e" in kind)
    return 1 if single_tc else 2


def fused_f_proj(x2d, wf, wp, bp_eff, *, tm=None):
    """out[M, C] = (x2d[M, C] @ wf[C, 2C]) @ wp[2C, C] + bp_eff, tiled over M.

    - No host-side pad/slice: out_shape is exactly (M, C).  A final partial
      M-block (if any) reads a few garbage rows that never feed a reduction,
      and the corresponding output rows are masked on store by Pallas.
    - tm: one block on single-TC chips; a 2-way "parallel" split on dual-core
      chips, rounded up to the 8-row sublane granule and capped so the working
      set (double-buffered x/out tiles + bf16 scratch + ~0.5 MB resident
      weights) stays at a few MB -- far inside every generation's VMEM, so no
      vmem_limit override is needed.
    - Weight / bias blocks use constant index_maps (resident).  pl.Buffered(1)
      would halve their VMEM footprint but is irrelevant (~0.5 MB) at dim=256,
      so it is omitted for maximum compile robustness.
    """
    M, C = x2d.shape
    Cw, C2 = wf.shape
    assert C == Cw and wp.shape == (C2, C) and bp_eff.shape == (C,)

    if tm is None:
        tm = pl.cdiv(M, _token_splits())
        tm = min(pl.cdiv(tm, 8) * 8, 1024)
    assert tm % 8 == 0
    grid = (pl.cdiv(M, tm),)

    bp2 = bp_eff.reshape(1, C).astype(jnp.float32)
    out_dtype = x2d.dtype

    cost = pl.CostEstimate(
        flops=2 * M * C * C2 + 2 * M * C2 * C,
        transcendentals=0,
        bytes_accessed=(
            x2d.size * x2d.dtype.itemsize           # read x
            + M * C * jnp.dtype(out_dtype).itemsize  # write out
            + wf.size * wf.dtype.itemsize            # bf16 Wf
            + wp.size * wp.dtype.itemsize            # bf16 Wp
            + C * 4                                  # folded bias
        ),
    )

    return pl.pallas_call(
        _fused_f_proj_kernel,
        out_shape=jax.ShapeDtypeStruct((M, C), out_dtype),
        grid_spec=pltpu.PrefetchScalarGridSpec(
            num_scalar_prefetch=0,
            grid=grid,
            in_specs=[
                pl.BlockSpec((tm, C), lambda i: (i, 0)),   # x tile
                pl.BlockSpec((C, C2), lambda i: (0, 0)),   # Wf (bf16, resident)
                pl.BlockSpec((C2, C), lambda i: (0, 0)),   # Wp (bf16, resident)
                pl.BlockSpec((1, C), lambda i: (0, 0)),    # folded bias (f32)
            ],
            out_specs=pl.BlockSpec((tm, C), lambda i: (i, 0)),
            scratch_shapes=[pltpu.VMEM((tm, C2), jnp.bfloat16)],
        ),
        compiler_params=pltpu.CompilerParams(
            dimension_semantics=("parallel",),
        ),
        cost_estimate=cost,
    )(x2d, wf, wp, bp2)


# ----------------------------------------------------------------------------
# Parameter construction (deterministic, in-script; PyTorch Linear shapes,
# stored pre-transposed as (in_features, out_features); weights in bf16 so the
# MXU runs at its native rate, biases kept f32 for accurate folding/adds).
# ----------------------------------------------------------------------------
def init_params(key, dim):
    k1, k2, k3, k4 = jax.random.split(key, 4)
    scale_f = 1.0 / jnp.sqrt(dim)
    scale_p = 1.0 / jnp.sqrt(2 * dim)
    return {
        # self.f = nn.Linear(dim, 2*dim, bias=True)
        "f_w": jax.random.uniform(
            k1, (dim, 2 * dim), jnp.float32, -scale_f, scale_f
        ).astype(jnp.bfloat16),
        "f_b": jax.random.uniform(k2, (2 * dim,), jnp.float32, -scale_f, scale_f),
        # self.proj = nn.Linear(2*dim, dim)
        "proj_w": jax.random.uniform(
            k3, (2 * dim, dim), jnp.float32, -scale_p, scale_p
        ).astype(jnp.bfloat16),
        "proj_b": jax.random.uniform(k4, (dim,), jnp.float32, -scale_p, scale_p),
    }


# ----------------------------------------------------------------------------
# FocalModulation.forward
# ----------------------------------------------------------------------------
def focal_modulation_forward(x, params):
    """x: (B, H, W, C) with C == 256, H == W == 14 (hard-coded by the module)."""
    B, H, W, C = x.shape
    assert C == 256 and H == 14 and W == 14, "module hard-codes 256 channels / 14x14"

    # x = self.f(x); ...permute/split/view/attn/mix/cat/permute... ; self.proj
    # With identity attn/mix the layout glue is a no-op, so both linears run
    # fused in a single Pallas kernel (intermediate kept in VMEM).
    # TODO(synk): the f-bias only reaches the output through Wp while attn/mix
    # are identity, so it is folded into the projection bias here; this fold
    # (and the fused structure) must be revisited when the real Attention /
    # ShiftViTBlock / MixShiftBlock implementations are reinstated.
    bp_eff = (
        params["f_b"] @ params["proj_w"].astype(jnp.float32) + params["proj_b"]
    )
    out = fused_f_proj(
        x.reshape(B * H * W, C), params["f_w"], params["proj_w"], bp_eff
    )
    # proj_drop(p=0.0) -> identity at inference; use_postln=False -> no LN.
    return out.reshape(B, H, W, C)


if __name__ == "__main__":
    B, H, W, dim = 2, 14, 14, 256
    key = jax.random.PRNGKey(0)
    kx, kp = jax.random.split(key)
    x = jax.random.normal(kx, (B, H, W, dim), dtype=jnp.float32)
    params = init_params(kp, dim)

    fwd = jax.jit(focal_modulation_forward)
    out = jax.block_until_ready(fwd(x, params))

    assert out.shape == (B, H, W, dim), out.shape
    assert jnp.all(jnp.isfinite(out))

    # Reference: plain-JAX f32 math with the same (bf16-stored) weights.  The
    # identity attn/mix glue chain is a provable no-op, so this matches the
    # original PyTorch data flow of the provided module.  Tolerance is relaxed
    # because the kernel uses bf16 activations / intermediate (f32 accumulate).
    wf32 = params["f_w"].astype(jnp.float32)
    wp32 = params["proj_w"].astype(jnp.float32)
    ref = (x.reshape(-1, dim) @ wf32 + params["f_b"]) @ wp32 + params["proj_b"]
    ref = ref.reshape(B, H, W, dim)
    assert jnp.allclose(out, ref, atol=2e-2, rtol=2e-2), float(
        jnp.max(jnp.abs(out - ref)))

    print("KERNEL_OK")
</pallas_src>

<mosaic_0001>
module attributes {stable_mosaic.version = 11 : i64} {
  func.func @_fused_f_proj_kernel(%arg0: i32, %arg1: memref<200x256xf32, #tpu.memory_space<vmem>>, %arg2: memref<256x512xbf16, #tpu.memory_space<vmem>>, %arg3: memref<512x256xbf16, #tpu.memory_space<vmem>>, %arg4: memref<1x256xf32, #tpu.memory_space<vmem>>, %arg5: memref<200x256xf32, #tpu.memory_space<vmem>>, %arg6: memref<200x512xbf16, #tpu.memory_space<vmem>>) attributes {dimension_semantics = [#tpu.dimension_semantics<parallel>], iteration_bounds = array<i64: 2>, scalar_prefetch = 0 : i64, scratch_operands = 1 : i64, tpu.core_type = #tpu.core_type<tc>, window_params = [{transform_indices = @transform_0, window_bounds = array<i64: 200, 256>}, {pipeline_mode = #tpu.pipeline_mode<synchronous>, transform_indices = @transform_1, window_bounds = array<i64: 256, 512>}, {pipeline_mode = #tpu.pipeline_mode<synchronous>, transform_indices = @transform_2, window_bounds = array<i64: 512, 256>}, {pipeline_mode = #tpu.pipeline_mode<synchronous>, transform_indices = @transform_3, window_bounds = array<i64: 1, 256>}, {transform_indices = @transform_4, window_bounds = array<i64: 200, 256>}]} {
    %c0 = arith.constant 0 : index
    %c0_0 = arith.constant 0 : index
    %0 = vector.load %arg1[%c0, %c0_0] : memref<200x256xf32, #tpu.memory_space<vmem>>, vector<200x256xf32>
    %1 = arith.truncf %0 : vector<200x256xf32> to vector<200x256xbf16>
    %c0_1 = arith.constant 0 : index
    %c0_2 = arith.constant 0 : index
    %2 = vector.load %arg2[%c0_1, %c0_2] : memref<256x512xbf16, #tpu.memory_space<vmem>>, vector<256x512xbf16>
    %cst = arith.constant dense<0.000000e+00> : vector<200x512xf32>
    %3 = tpu.matmul %1, %2, %cst {dimension_numbers = #tpu.dot_dimension_numbers<[1], [0], [0], [1], [0, 0, 1, 1], [], []>} : vector<200x256xbf16>, vector<256x512xbf16>, vector<200x512xf32> -> vector<200x512xf32>
    %4 = arith.truncf %3 : vector<200x512xf32> to vector<200x512xbf16>
    %c0_3 = arith.constant 0 : index
    %c0_4 = arith.constant 0 : index
    %5 = vector.load %arg6[%c0_3, %c0_4] : memref<200x512xbf16, #tpu.memory_space<vmem>>, vector<200x512xbf16>
    tpu.vector_store %arg6[%c0_3, %c0_4], %4 {strides = array<i32>} : memref<200x512xbf16, #tpu.memory_space<vmem>>, vector<200x512xbf16>,
    %c0_5 = arith.constant 0 : index
    %c0_6 = arith.constant 0 : index
    %6 = vector.load %arg6[%c0_5, %c0_6] : memref<200x512xbf16, #tpu.memory_space<vmem>>, vector<200x512xbf16>
    %c0_7 = arith.constant 0 : index
    %c0_8 = arith.constant 0 : index
    %7 = vector.load %arg3[%c0_7, %c0_8] : memref<512x256xbf16, #tpu.memory_space<vmem>>, vector<512x256xbf16>
    %cst_9 = arith.constant dense<0.000000e+00> : vector<200x256xf32>
    %8 = tpu.matmul %6, %7, %cst_9 {dimension_numbers = #tpu.dot_dimension_numbers<[1], [0], [0], [1], [0, 0, 1, 1], [], []>} : vector<200x512xbf16>, vector<512x256xbf16>, vector<200x256xf32> -> vector<200x256xf32>
    %c0_10 = arith.constant 0 : index
    %c0_11 = arith.constant 0 : index
    %9 = vector.load %arg4[%c0_10, %c0_11] : memref<1x256xf32, #tpu.memory_space<vmem>>, vector<1x256xf32>
    %10 = vector.broadcast %9 : vector<1x256xf32> to vector<200x256xf32>
    %11 = arith.addf %8, %10 : vector<200x256xf32>
    %c0_12 = arith.constant 0 : index
    %c0_13 = arith.constant 0 : index
    %12 = vector.load %arg5[%c0_12, %c0_13] : memref<200x256xf32, #tpu.memory_space<vmem>>, vector<200x256xf32>
    tpu.vector_store %arg5[%c0_12, %c0_13], %11 {strides = array<i32>} : memref<200x256xf32, #tpu.memory_space<vmem>>, vector<200x256xf32>,
    return
  }
  func.func @transform_0(%arg0: i32) -> (i32, i32) {
    %c0_i32 = arith.constant 0 : i32
    %c0_i32_0 = arith.constant 0 : i32
    return %arg0, %c0_i32 : i32, i32
  }
  func.func @transform_1(%arg0: i32) -> (i32, i32) {
    %c0_i32 = arith.constant 0 : i32
    %c0_i32_0 = arith.constant 0 : i32
    %c0_i32_1 = arith.constant 0 : i32
    return %c0_i32, %c0_i32_0 : i32, i32
  }
  func.func @transform_2(%arg0: i32) -> (i32, i32) {
    %c0_i32 = arith.constant 0 : i32
    %c0_i32_0 = arith.constant 0 : i32
    %c0_i32_1 = arith.constant 0 : i32
    return %c0_i32, %c0_i32_0 : i32, i32
  }
  func.func @transform_3(%arg0: i32) -> (i32, i32) {
    %c0_i32 = arith.constant 0 : i32
    %c0_i32_0 = arith.constant 0 : i32
    %c0_i32_1 = arith.constant 0 : i32
    return %c0_i32, %c0_i32_0 : i32, i32
  }
  func.func @transform_4(%arg0: i32) -> (i32, i32) {
    %c0_i32 = arith.constant 0 : i32
    %c0_i32_0 = arith.constant 0 : i32
    return %arg0, %c0_i32 : i32, i32
  }
}

</mosaic_0001>

<llo_original>
// kernel: focal_modulation_forward.1
$region0: #{focal_modulation_forward.1}
  #allocation0 [shape = 'u32[]', space=smem, size = 0x4, offset = 0x4, fixed_abs, tag = 'smem constant byte address 0x4 - core index']
  #allocation1 [shape = 'u32[144,128]{1,0:T(1,128)}', space=vmem, size = 0x12000, scoped, tag = 'internal scratch']
  #allocation2 [shape = 'bf16[200,512]{1,0:T(8,128)(2,1)}', space=vmem, size = 0x32000, scoped, tag = 'scratch operand']
  %s0 = inlined_call_operand.vmem [shape: f32[392,256], index: 0, kind: input, shape index: {}]
  %s1 = inlined_call_operand.vmem [shape: bf16[256,512], index: 1, kind: input, shape index: {}]
  %s2 = inlined_call_operand.vmem [shape: bf16[512,256], index: 2, kind: input, shape index: {}]
  %s3 = inlined_call_operand.vmem [shape: f32[1,256], index: 3, kind: input, shape index: {}]
  %s4 = inlined_call_operand.vmem [shape: f32[392,256], index: 4, kind: output, shape index: {}]
  %s5 = sld [smem:[#allocation0]]
  $region75: #{focal_modulation_forward.1} parent=0
    _
  %s7 = ssub.s32 1, %s5
  %s8 = scalar_select 0, %s7, %s5
  $region1: #{focal_modulation_forward.1} parent=0
    #allocation3 [shape = 'u8[409600]{0}', space=vmem, size = 0x64000, scoped, tag = 'output window, operand 0']
    loop: start=0, step=1, limit=4
    $region2: #{focal_modulation_forward.1} parent=1 // loop_pre_header
      _
    $region3: #{focal_modulation_forward.1} parent=1 // loop_header
      %s10 = sphi 0, %s14
      %p11 = scmp.ge.s32.totalorder %s10, 4
      %s20 = sphi 0, %s22
      %s23 = sphi 0, %s20
      %s24 = sphi 0, %s23
      %s40 = sphi 0, %s24
      %s44 = sphi 0, %s44
      %s46 = sphi 0, %s44
      %s47 = sphi 0, %s46
      %s61 = sphi 0, %s47
      %s65 = sphi 0, %s65
      %s67 = sphi 0, %s65
      %s68 = sphi 0, %s67
      %s82 = sphi 0, %s68
      %s86 = sphi 0, %s86
      %s88 = sphi 0, %s86
      %s89 = sphi 0, %s88
      %s103 = sphi 0, %s89
      %s109 = sphi 0, %s111
      %s112 = sphi 0, %s109
      %s113 = sphi 0, %s112
      %s129 = sphi 0, %s113
    $region4: #{focal_modulation_forward.1} parent=1 // loop_header_branch
      %13 = sbr.rel (%p11) target = $region8
    $region5: #{focal_modulation_forward.1} parent=1 // loop_body
      %s15 = ssub.s32 %s10, 1
      %s16 = ssub.s32 %s10, 2
      %s17 = sadd.s32 %s10, 1
      %s18 = ssub.s32 %s10, %s17
      %p19 = scmp.eq.s32.totalorder %s18, 0
      %s21 = sadd.s32 %s20, 1
      %s22 = scalar_select %p19, %s20, %s21
      %p25 = pneg %p19
      %p26 = scmp.eq.s32.totalorder %s10, 1
      %p27 = por %p25, %p26
      %p28 = scmp.ne.s32.totalorder %s20, %s23
      %p29 = scmp.eq.s32.totalorder %s10, 0
      %p30 = por %p28, %p29
      %p31 = scmp.ne.s32.totalorder %s20, %s23
      %p32 = scmp.eq.s32.totalorder %s15, 1
      %p33 = por %p31, %p32
      %p34 = scmp.ne.s32.totalorder %s23, %s24
      %p35 = scmp.eq.s32.totalorder %s15, 0
      %p36 = por %p34, %p35
      %p37 = scmp.ne.s32.totalorder %s23, %s24
      %p38 = scmp.eq.s32.totalorder %s16, 1
      %p39 = por %p37, %p38
      %p41 = scmp.ne.s32.totalorder %s24, %s40
      %p42 = scmp.eq.s32.totalorder %s16, 0
      %p43 = por %p41, %p42
      %s45 = sadd.s32 %s44, 1
      %p48 = scmp.eq.s32.totalorder %s10, 1
      %p49 = scmp.ne.s32.totalorder %s44, %s46
      %p50 = scmp.eq.s32.totalorder %s10, 0
      %p51 = por %p49, %p50
      %p52 = scmp.ne.s32.totalorder %s44, %s46
      %p53 = scmp.eq.s32.totalorder %s15, 1
      %p54 = por %p52, %p53
      %p55 = scmp.ne.s32.totalorder %s46, %s47
      %p56 = scmp.eq.s32.totalorder %s15, 0
      %p57 = por %p55, %p56
      %p58 = scmp.ne.s32.totalorder %s46, %s47
      %p59 = scmp.eq.s32.totalorder %s16, 1
      %p60 = por %p58, %p59
      %p62 = scmp.ne.s32.totalorder %s47, %s61
      %p63 = scmp.eq.s32.totalorder %s16, 0
      %p64 = por %p62, %p63
      %s66 = sadd.s32 %s65, 1
      %p69 = scmp.eq.s32.totalorder %s10, 1
      %p70 = scmp.ne.s32.totalorder %s65, %s67
      %p71 = scmp.eq.s32.totalorder %s10, 0
      %p72 = por %p70, %p71
      %p73 = scmp.ne.s32.totalorder %s65, %s67
      %p74 = scmp.eq.s32.totalorder %s15, 1
      %p75 = por %p73, %p74
      %p76 = scmp.ne.s32.totalorder %s67, %s68
      %p77 = scmp.eq.s32.totalorder %s15, 0
      %p78 = por %p76, %p77
      %p79 = scmp.ne.s32.totalorder %s67, %s68
      %p80 = scmp.eq.s32.totalorder %s16, 1
      %p81 = por %p79, %p80
      %p83 = scmp.ne.s32.totalorder %s68, %s82
      %p84 = scmp.eq.s32.totalorder %s16, 0
      %p85 = por %p83, %p84
      %s87 = sadd.s32 %s86, 1
      %p90 = scmp.eq.s32.totalorder %s10, 1
      %p91 = scmp.ne.s32.totalorder %s86, %s88
      %p92 = scmp.eq.s32.totalorder %s10, 0
      %p93 = por %p91, %p92
      %p94 = scmp.ne.s32.totalorder %s86, %s88
      %p95 = scmp.eq.s32.totalorder %s15, 1
      %p96 = por %p94, %p95
      %p97 = scmp.ne.s32.totalorder %s88, %s89
      %p98 = scmp.eq.s32.totalorder %s15, 0
      %p99 = por %p97, %p98
      %p100 = scmp.ne.s32.totalorder %s88, %s89
      %p101 = scmp.eq.s32.totalorder %s16, 1
      %p102 = por %p100, %p101
      %p104 = scmp.ne.s32.totalorder %s89, %s103
      %p105 = scmp.eq.s32.totalorder %s16, 0
      %p106 = por %p104, %p105
      %s107 = ssub.s32 %s10, %s17
      %p108 = scmp.eq.s32.totalorder %s107, 0
      %s110 = sadd.s32 %s109, 1
      %s111 = scalar_select %p108, %s109, %s110
      %p114 = pneg %p108
      %p115 = scmp.eq.s32.totalorder %s10, 1
      %p116 = por %p114, %p115
      %p117 = scmp.ne.s32.totalorder %s109, %s112
      %p118 = scmp.eq.s32.totalorder %s10, 0
      %p119 = por %p117, %p118
      %p120 = scmp.ne.s32.totalorder %s109, %s112
      %p121 = scmp.eq.s32.totalorder %s15, 1
      %p122 = por %p120, %p121
      %p123 = scmp.ne.s32.totalorder %s112, %s113
      %p124 = scmp.eq.s32.totalorder %s15, 0
      %p125 = por %p123, %p124
      %p126 = scmp.ne.s32.totalorder %s112, %s113
      %p127 = scmp.eq.s32.totalorder %s16, 1
      %p128 = por %p126, %p127
      %p130 = scmp.ne.s32.totalorder %s113, %s129
      %p131 = scmp.eq.s32.totalorder %s16, 0
      %p132 = por %p130, %p131
      %p133 = scmp.le.s32.totalorder 1, %s10
      %p134 = scmp.lt.s32.totalorder %s10, 3
      %p135 = pnand %p133, %p134
      %p136 = pneg %p135
      // Predicated region
      $region9: #{focal_modulation_forward.1} parent=5 // pred_check
        _
      $region10: #{focal_modulation_forward.1} parent=5 // pred_check_branch
        %138 = sbr.rel (%p135) target = $region12
      $region11: #{focal_modulation_forward.1} parent=5 // pred_region
        %s139 = ssub.s32 %s10, 1
        // Predicated region
        $region13: #{focal_modulation_forward.1} parent=11 // pred_check
          %p140 = pneg %p57
        $region14: #{focal_modulation_forward.1} parent=11 // pred_check_branch
          %142 = sbr.rel (%p140) target = $region16
        $region15: #{focal_modulation_forward.1} parent=11 // pred_region
          _
        $region16: #{focal_modulation_forward.1} parent=11 // pred_fallthru
          _
        // Predicated region
        $region17: #{focal_modulation_forward.1} parent=11 // pred_check
          %p143 = pneg %p78
        $region18: #{focal_modulation_forward.1} parent=11 // pred_check_branch
          %145 = sbr.rel (%p143) target = $region20
        $region19: #{focal_modulation_forward.1} parent=11 // pred_region
          _
        $region20: #{focal_modulation_forward.1} parent=11 // pred_fallthru
          _
        // Predicated region
        $region21: #{focal_modulation_forward.1} parent=11 // pred_check
          %p146 = pneg %p99
        $region22: #{focal_modulation_forward.1} parent=11 // pred_check_branch
          %148 = sbr.rel (%p146) target = $region24
        $region23: #{focal_modulation_forward.1} parent=11 // pred_region
          _
        $region24: #{focal_modulation_forward.1} parent=11 // pred_fallthru
          _
      $region12: #{focal_modulation_forward.1} parent=5 // pred_fallthru
        _
      %p149 = scmp.lt.s32.totalorder %s10, 2
      // Predicated region
      $region25: #{focal_modulation_forward.1} parent=5 // pred_check
        %p150 = pneg %p149
      $region26: #{focal_modulation_forward.1} parent=5 // pred_check_branch
        %152 = sbr.rel (%p150) target = $region28
      $region27: #{focal_modulation_forward.1} parent=5 // pred_region
        // Predicated region
        $region29: #{focal_modulation_forward.1} parent=27 // pred_check
          %p153 = pneg %p30
        $region30: #{focal_modulation_forward.1} parent=27 // pred_check_branch
          %155 = sbr.rel (%p153) target = $region32
        $region31: #{focal_modulation_forward.1} parent=27 // pred_region
          %s156 = smul.u32 25, %s10
          %s157 = ssub.s32 49, %s156
          %p158 = scmp.lt.s32.totalorder %s157, 25
          %s159 = scalar_select %p158, %s157, 25
          %s160 = smul.u32 128, %s159
          %s161 = smul.u32 %s160, 2
          %p162 = scmp.lt.s32.totalorder %s156, 48
          %s163 = scalar_select %p162, %s156, 48
          %s164 = smul.addr %s163, 2
          %s165 = smul.addr %s164, 8
          %s166 = scalar_lea.vmem %s0, %s165
          %s167 = smul.u32 25, %s10
          %s168 = ssub.s32 49, %s167
          %p169 = scmp.lt.s32.totalorder %s168, 25
          %s170 = scalar_select %p169, %s168, 25
          %s171 = smul.u32 128, %s170
          %s172 = smul.u32 %s171, 2
        $region32: #{focal_modulation_forward.1} parent=27 // pred_fallthru
          _
      $region28: #{focal_modulation_forward.1} parent=5 // pred_fallthru
        _
      %p173 = scmp.le.s32.totalorder 1, %s10
      %p174 = scmp.lt.s32.totalorder %s10, 3
      %p175 = pnand %p173, %p174
      %p176 = pneg %p175
      // Predicated region
      $region33: #{focal_modulation_forward.1} parent=5 // pred_check
        _
      $region34: #{focal_modulation_forward.1} parent=5 // pred_check_branch
        %178 = sbr.rel (%p175) target = $region36
      $region35: #{focal_modulation_forward.1} parent=5 // pred_region
        %s179 = ssub.s32 %s10, 1
        %s180 = smul.u32 25, %s15
        %s181 = ssub.s32 49, %s180
        %p182 = scmp.lt.s32.totalorder %s181, 25
        %s183 = scalar_select %p182, %s181, 25
        %s184 = smul.u32 128, %s183
        %s185 = smul.u32 %s184, 2
        %p186 = scmp.lt.s32.totalorder %s180, 48
        %s187 = scalar_select %p186, %s180, 48
        %s188 = smul.addr %s187, 2
        %s189 = smul.addr %s188, 8
        %s190 = scalar_lea.vmem %s0, %s189
        %p191 = pneg %p36
        %p192 = pneg %p33
        %p193 = pneg %p57
        %p194 = pneg %p54
        %p195 = pneg %p78
        %p196 = pneg %p75
        %p197 = pneg %p99
        %p198 = pneg %p96
        %p199 = pneg %p125
        %p200 = pneg %p122
        %s201 = sand.u32 %s112, 1
        %s202 = sand.u32 %s112, 1
        %s203 = smul.addr %s202, 400
        %s204 = scalar_lea.vmem [#allocation3], %s203
        %s205 = smul.u32 25, %s15
        %s206 = ssub.s32 49, %s205
        %p207 = scmp.lt.s32.totalorder %s206, 25
        %s208 = scalar_select %p207, %s206, 25
        %s209 = smul.u32 128, %s208
        %s210 = smul.u32 %s209, 2
        %p211 = scmp.lt.s32.totalorder %s205, 48
        %s212 = scalar_select %p211, %s205, 48
        %s213 = smul.addr %s212, 2
        %s214 = smul.addr %s213, 8
        %s215 = scalar_lea.vmem %s0, %s214
        %s216 = smul.u32 25, %s15
        %s217 = ssub.s32 49, %s216
        %p218 = scmp.lt.s32.totalorder %s217, 25
        %s219 = scalar_select %p218, %s217, 25
        %s220 = smul.u32 128, %s219
        %s221 = smul.u32 %s220, 2
        %s222 = smul.u32 25, %s15
        %s223 = ssub.s32 49, %s222
        %p224 = scmp.lt.s32.totalorder %s223, 25
        %s225 = scalar_select %p224, %s223, 25
        %s226 = smul.u32 128, %s225
        %s227 = smul.u32 %s226, 2
        %v228 = vld [vmem:[%s215] sm:$0xff]
        %v229 = vld [vmem:[%s215 + $0x8] sm:$0xff]
        %v230 = vld [vmem:[%s215 + $0x10] sm:$0xff]
        %v231 = vld [vmem:[%s215 + $0x18] sm:$0xff]
        %v232 = vld [vmem:[%s215 + $0x20] sm:$0xff]
        %v233 = vld [vmem:[%s215 + $0x28] sm:$0xff]
        %v234 = vld [vmem:[%s215 + $0x30] sm:$0xff]
        %v235 = vld [vmem:[%s215 + $0x38] sm:$0xff]
        %v236 = vld [vmem:[%s215 + $0x40] sm:$0xff]
        %v237 = vld [vmem:[%s215 + $0x48] sm:$0xff]
        %v238 = vld [vmem:[%s215 + $0x50] sm:$0xff]
        %v239 = vld [vmem:[%s215 + $0x58] sm:$0xff]
        %v240 = vld [vmem:[%s215 + $0x60] sm:$0xff]
        %v241 = vld [vmem:[%s215 + $0x68] sm:$0xff]
        %v242 = vld [vmem:[%s215 + $0x70] sm:$0xff]
        %v243 = vld [vmem:[%s215 + $0x78] sm:$0xff]
        %v244 = vld [vmem:[%s215 + $0x80] sm:$0xff]
        %v245 = vld [vmem:[%s215 + $0x88] sm:$0xff]
        %v246 = vld [vmem:[%s215 + $0x90] sm:$0xff]
        %v247 = vld [vmem:[%s215 + $0x98] sm:$0xff]
        %v248 = vld [vmem:[%s215 + $0xa0] sm:$0xff]
        %v249 = vld [vmem:[%s215 + $0xa8] sm:$0xff]
        %v250 = vld [vmem:[%s215 + $0xb0] sm:$0xff]
        %v251 = vld [vmem:[%s215 + $0xb8] sm:$0xff]
        %v252 = vld [vmem:[%s215 + $0xc0] sm:$0xff]
        %v253 = vld [vmem:[%s215 + $0xc8] sm:$0xff]
        %v254 = vld [vmem:[%s215 + $0xd0] sm:$0xff]
        %v255 = vld [vmem:[%s215 + $0xd8] sm:$0xff]
        %v256 = vld [vmem:[%s215 + $0xe0] sm:$0xff]
        %v257 = vld [vmem:[%s215 + $0xe8] sm:$0xff]
        %v258 = vld [vmem:[%s215 + $0xf0] sm:$0xff]
        %v259 = vld [vmem:[%s215 + $0xf8] sm:$0xff]
        %v260 = vld [vmem:[%s215 + $0x100] sm:$0xff]
        %v261 = vld [vmem:[%s215 + $0x108] sm:$0xff]
        %v262 = vld [vmem:[%s215 + $0x110] sm:$0xff]
        %v263 = vld [vmem:[%s215 + $0x118] sm:$0xff]
        %v264 = vld [vmem:[%s215 + $0x120] sm:$0xff]
        %v265 = vld [vmem:[%s215 + $0x128] sm:$0xff]
        %v266 = vld [vmem:[%s215 + $0x130] sm:$0xff]
        %v267 = vld [vmem:[%s215 + $0x138] sm:$0xff]
        %v268 = vld [vmem:[%s215 + $0x140] sm:$0xff]
        %v269 = vld [vmem:[%s215 + $0x148] sm:$0xff]
        %v270 = vld [vmem:[%s215 + $0x150] sm:$0xff]
        %v271 = vld [vmem:[%s215 + $0x158] sm:$0xff]
        %v272 = vld [vmem:[%s215 + $0x160] sm:$0xff]
        %v273 = vld [vmem:[%s215 + $0x168] sm:$0xff]
        %v274 = vld [vmem:[%s215 + $0x170] sm:$0xff]
        %v275 = vld [vmem:[%s215 + $0x178] sm:$0xff]
        %v276 = vld [vmem:[%s215 + $0x180] sm:$0xff]
        %v277 = vld [vmem:[%s215 + $0x188] sm:$0xff]
        %v278 = vpack.c.bf16 %v230, %v228
        %v279 = vpack.c.bf16 %v231, %v229
        %v280 = vpack.c.bf16 %v234, %v232
        %v281 = vpack.c.bf16 %v235, %v233
        %v282 = vpack.c.bf16 %v238, %v236
        %v283 = vpack.c.bf16 %v239, %v237
        %v284 = vpack.c.bf16 %v242, %v240
        %v285 = vpack.c.bf16 %v243, %v241
        %v286 = vpack.c.bf16 %v246, %v244
        %v287 = vpack.c.bf16 %v247, %v245
        %v288 = vpack.c.bf16 %v250, %v248
        %v289 = vpack.c.bf16 %v251, %v249
        %v290 = vpack.c.bf16 %v254, %v252
        %v291 = vpack.c.bf16 %v255, %v253
        %v292 = vpack.c.bf16 %v258, %v256
        %v293 = vpack.c.bf16 %v259, %v257
        %v294 = vpack.c.bf16 %v262, %v260
        %v295 = vpack.c.bf16 %v263, %v261
        %v296 = vpack.c.bf16 %v266, %v264
        %v297 = vpack.c.bf16 %v267, %v265
        %v298 = vpack.c.bf16 %v270, %v268
        %v299 = vpack.c.bf16 %v271, %v269
        %v300 = vpack.c.bf16 %v274, %v272
        %v301 = vpack.c.bf16 %v275, %v273
        %v302 = vpack.c.bf16 %v276, %v276
        %v303 = vpack.c.bf16 %v277, %v277
        %v304 = vld [vmem:[%s1] sm:$0xff]
        %v305 = vld [vmem:[%s1 + $0x8] sm:$0xff]
        %v306 = vld [vmem:[%s1 + $0x10] sm:$0xff]
        %v307 = vld [vmem:[%s1 + $0x18] sm:$0xff]
        %v308 = vld [vmem:[%s1 + $0x20] sm:$0xff]
        %v309 = vld [vmem:[%s1 + $0x28] sm:$0xff]
        %v310 = vld [vmem:[%s1 + $0x30] sm:$0xff]
        %v311 = vld [vmem:[%s1 + $0x38] sm:$0xff]
        %v312 = vld [vmem:[%s1 + $0x40] sm:$0xff]
        %v313 = vld [vmem:[%s1 + $0x48] sm:$0xff]
        %v314 = vld [vmem:[%s1 + $0x50] sm:$0xff]
        %v315 = vld [vmem:[%s1 + $0x58] sm:$0xff]
        %v316 = vld [vmem:[%s1 + $0x60] sm:$0xff]
        %v317 = vld [vmem:[%s1 + $0x68] sm:$0xff]
        %v318 = vld [vmem:[%s1 + $0x70] sm:$0xff]
        %v319 = vld [vmem:[%s1 + $0x78] sm:$0xff]
        %v320 = vld [vmem:[%s1 + $0x80] sm:$0xff]
        %v321 = vld [vmem:[%s1 + $0x88] sm:$0xff]
        %v322 = vld [vmem:[%s1 + $0x90] sm:$0xff]
        %v323 = vld [vmem:[%s1 + $0x98] sm:$0xff]
        %v324 = vld [vmem:[%s1 + $0xa0] sm:$0xff]
        %v325 = vld [vmem:[%s1 + $0xa8] sm:$0xff]
        %v326 = vld [vmem:[%s1 + $0xb0] sm:$0xff]
        %v327 = vld [vmem:[%s1 + $0xb8] sm:$0xff]
        %v328 = vld [vmem:[%s1 + $0xc0] sm:$0xff]
        %v329 = vld [vmem:[%s1 + $0xc8] sm:$0xff]
        %v330 = vld [vmem:[%s1 + $0xd0] sm:$0xff]
        %v331 = vld [vmem:[%s1 + $0xd8] sm:$0xff]
        %v332 = vld [vmem:[%s1 + $0xe0] sm:$0xff]
        %v333 = vld [vmem:[%s1 + $0xe8] sm:$0xff]
        %v334 = vld [vmem:[%s1 + $0xf0] sm:$0xff]
        %v335 = vld [vmem:[%s1 + $0xf8] sm:$0xff]
        %v336 = vld [vmem:[%s1 + $0x100] sm:$0xff]
        %v337 = vld [vmem:[%s1 + $0x108] sm:$0xff]
        %v338 = vld [vmem:[%s1 + $0x110] sm:$0xff]
        %v339 = vld [vmem:[%s1 + $0x118] sm:$0xff]
        %v340 = vld [vmem:[%s1 + $0x120] sm:$0xff]
        %v341 = vld [vmem:[%s1 + $0x128] sm:$0xff]
        %v342 = vld [vmem:[%s1 + $0x130] sm:$0xff]
        %v343 = vld [vmem:[%s1 + $0x138] sm:$0xff]
        %v344 = vld [vmem:[%s1 + $0x140] sm:$0xff]
        %v345 = vld [vmem:[%s1 + $0x148] sm:$0xff]
        %v346 = vld [vmem:[%s1 + $0x150] sm:$0xff]
        %v347 = vld [vmem:[%s1 + $0x158] sm:$0xff]
        %v348 = vld [vmem:[%s1 + $0x160] sm:$0xff]
        %v349 = vld [vmem:[%s1 + $0x168] sm:$0xff]
        %v350 = vld [vmem:[%s1 + $0x170] sm:$0xff]
        %v351 = vld [vmem:[%s1 + $0x178] sm:$0xff]
        %v352 = vld [vmem:[%s1 + $0x180] sm:$0xff]
        %v353 = vld [vmem:[%s1 + $0x188] sm:$0xff]
        %v354 = vld [vmem:[%s1 + $0x190] sm:$0xff]
        %v355 = vld [vmem:[%s1 + $0x198] sm:$0xff]
        %v356 = vld [vmem:[%s1 + $0x1a0] sm:$0xff]
        %v357 = vld [vmem:[%s1 + $0x1a8] sm:$0xff]
        %v358 = vld [vmem:[%s1 + $0x1b0] sm:$0xff]
        %v359 = vld [vmem:[%s1 + $0x1b8] sm:$0xff]
        %v360 = vld [vmem:[%s1 + $0x1c0] sm:$0xff]
        %v361 = vld [vmem:[%s1 + $0x1c8] sm:$0xff]
        %v362 = vld [vmem:[%s1 + $0x1d0] sm:$0xff]
        %v363 = vld [vmem:[%s1 + $0x1d8] sm:$0xff]
        %v364 = vld [vmem:[%s1 + $0x1e0] sm:$0xff]
        %v365 = vld [vmem:[%s1 + $0x1e8] sm:$0xff]
        %v366 = vld [vmem:[%s1 + $0x1f0] sm:$0xff]
        %v367 = vld [vmem:[%s1 + $0x1f8] sm:$0xff]
        %v432 = vunpack.c.l.b16 %v304
        %v433 = vunpack.c.h.b16 %v304
        %v434 = vunpack.c.l.b16 %v305
        %v435 = vunpack.c.h.b16 %v305
        %v436 = vunpack.c.l.b16 %v306
        %v437 = vunpack.c.h.b16 %v306
        %v438 = vunpack.c.l.b16 %v307
        %v439 = vunpack.c.h.b16 %v307
        %v440 = vunpack.c.l.b16 %v308
        %v441 = vunpack.c.h.b16 %v308
        %v442 = vunpack.c.l.b16 %v309
        %v443 = vunpack.c.h.b16 %v309
        %v444 = vunpack.c.l.b16 %v310
        %v445 = vunpack.c.h.b16 %v310
        %v446 = vunpack.c.l.b16 %v311
        %v447 = vunpack.c.h.b16 %v311
        %v448 = vunpack.c.l.b16 %v312
        %v449 = vunpack.c.h.b16 %v312
        %v450 = vunpack.c.l.b16 %v313
        %v451 = vunpack.c.h.b16 %v313
        %v452 = vunpack.c.l.b16 %v314
        %v453 = vunpack.c.h.b16 %v314
        %v454 = vunpack.c.l.b16 %v315
        %v455 = vunpack.c.h.b16 %v315
        %v456 = vunpack.c.l.b16 %v316
        %v457 = vunpack.c.h.b16 %v316
        %v458 = vunpack.c.l.b16 %v317
        %v459 = vunpack.c.h.b16 %v317
        %v460 = vunpack.c.l.b16 %v318
        %v461 = vunpack.c.h.b16 %v318
        %v462 = vunpack.c.l.b16 %v319
        %v463 = vunpack.c.h.b16 %v319
        %v464 = vunpack.c.l.b16 %v320
        %v465 = vunpack.c.h.b16 %v320
        %v466 = vunpack.c.l.b16 %v321
        %v467 = vunpack.c.h.b16 %v321
        %v468 = vunpack.c.l.b16 %v322
        %v469 = vunpack.c.h.b16 %v322
        %v470 = vunpack.c.l.b16 %v323
        %v471 = vunpack.c.h.b16 %v323
        %v472 = vunpack.c.l.b16 %v324
        %v473 = vunpack.c.h.b16 %v324
        %v474 = vunpack.c.l.b16 %v325
        %v475 = vunpack.c.h.b16 %v325
        %v476 = vunpack.c.l.b16 %v326
        %v477 = vunpack.c.h.b16 %v326
        %v478 = vunpack.c.l.b16 %v327
        %v479 = vunpack.c.h.b16 %v327
        %v480 = vunpack.c.l.b16 %v328
        %v481 = vunpack.c.h.b16 %v328
        %v482 = vunpack.c.l.b16 %v329
        %v483 = vunpack.c.h.b16 %v329
        %v484 = vunpack.c.l.b16 %v330
        %v485 = vunpack.c.h.b16 %v330
        %v486 = vunpack.c.l.b16 %v331
        %v487 = vunpack.c.h.b16 %v331
        %v488 = vunpack.c.l.b16 %v332
        %v489 = vunpack.c.h.b16 %v332
        %v490 = vunpack.c.l.b16 %v333
        %v491 = vunpack.c.h.b16 %v333
        %v492 = vunpack.c.l.b16 %v334
        %v493 = vunpack.c.h.b16 %v334
        %v494 = vunpack.c.l.b16 %v335
        %v495 = vunpack.c.h.b16 %v335
        %v496 = vunpack.c.l.b16 %v336
        %v497 = vunpack.c.h.b16 %v336
        %v498 = vunpack.c.l.b16 %v337
        %v499 = vunpack.c.h.b16 %v337
        %v500 = vunpack.c.l.b16 %v338
        %v501 = vunpack.c.h.b16 %v338
        %v502 = vunpack.c.l.b16 %v339
        %v503 = vunpack.c.h.b16 %v339
        %v504 = vunpack.c.l.b16 %v340
        %v505 = vunpack.c.h.b16 %v340
        %v506 = vunpack.c.l.b16 %v341
        %v507 = vunpack.c.h.b16 %v341
        %v508 = vunpack.c.l.b16 %v342
        %v509 = vunpack.c.h.b16 %v342
        %v510 = vunpack.c.l.b16 %v343
        %v511 = vunpack.c.h.b16 %v343
        %v512 = vunpack.c.l.b16 %v344
        %v513 = vunpack.c.h.b16 %v344
        %v514 = vunpack.c.l.b16 %v345
        %v515 = vunpack.c.h.b16 %v345
        %v516 = vunpack.c.l.b16 %v346
        %v517 = vunpack.c.h.b16 %v346
        %v518 = vunpack.c.l.b16 %v347
        %v519 = vunpack.c.h.b16 %v347
        %v520 = vunpack.c.l.b16 %v348
        %v521 = vunpack.c.h.b16 %v348
        %v522 = vunpack.c.l.b16 %v349
        %v523 = vunpack.c.h.b16 %v349
        %v524 = vunpack.c.l.b16 %v350
        %v525 = vunpack.c.h.b16 %v350
        %v526 = vunpack.c.l.b16 %v351
        %v527 = vunpack.c.h.b16 %v351
        %v528 = vunpack.c.l.b16 %v352
        %v529 = vunpack.c.h.b16 %v352
        %v530 = vunpack.c.l.b16 %v353
        %v531 = vunpack.c.h.b16 %v353
        %v532 = vunpack.c.l.b16 %v354
        %v533 = vunpack.c.h.b16 %v354
        %v534 = vunpack.c.l.b16 %v355
        %v535 = vunpack.c.h.b16 %v355
        %v536 = vunpack.c.l.b16 %v356
        %v537 = vunpack.c.h.b16 %v356
        %v538 = vunpack.c.l.b16 %v357
        %v539 = vunpack.c.h.b16 %v357
        %v540 = vunpack.c.l.b16 %v358
        %v541 = vunpack.c.h.b16 %v358
        %v542 = vunpack.c.l.b16 %v359
        %v543 = vunpack.c.h.b16 %v359
        %v544 = vunpack.c.l.b16 %v360
        %v545 = vunpack.c.h.b16 %v360
        %v546 = vunpack.c.l.b16 %v361
        %v547 = vunpack.c.h.b16 %v361
        %v548 = vunpack.c.l.b16 %v362
        %v549 = vunpack.c.h.b16 %v362
        %v550 = vunpack.c.l.b16 %v363
        %v551 = vunpack.c.h.b16 %v363
        %v552 = vunpack.c.l.b16 %v364
        %v553 = vunpack.c.h.b16 %v364
        %v554 = vunpack.c.l.b16 %v365
        %v555 = vunpack.c.h.b16 %v365
        %v556 = vunpack.c.l.b16 %v366
        %v557 = vunpack.c.h.b16 %v366
        %v558 = vunpack.c.l.b16 %v367
        %v559 = vunpack.c.h.b16 %v367
        %v560 = vpack.c.b16 %v436, %v432
        %v561 = vpack.c.b16 %v437, %v433
        %v562 = vpack.c.b16 %v438, %v434
        %v563 = vpack.c.b16 %v439, %v435
        %v564 = vpack.c.b16 %v444, %v440
        %v565 = vpack.c.b16 %v445, %v441
        %v566 = vpack.c.b16 %v446, %v442
        %v567 = vpack.c.b16 %v447, %v443
        %v568 = vpack.c.b16 %v452, %v448
        %v569 = vpack.c.b16 %v453, %v449
        %v570 = vpack.c.b16 %v454, %v450
        %v571 = vpack.c.b16 %v455, %v451
        %v572 = vpack.c.b16 %v460, %v456
        %v573 = vpack.c.b16 %v461, %v457
        %v574 = vpack.c.b16 %v462, %v458
        %v575 = vpack.c.b16 %v463, %v459
        %v576 = vpack.c.b16 %v468, %v464
        %v577 = vpack.c.b16 %v469, %v465
        %v578 = vpack.c.b16 %v470, %v466
        %v579 = vpack.c.b16 %v471, %v467
        %v580 = vpack.c.b16 %v476, %v472
        %v581 = vpack.c.b16 %v477, %v473
        %v582 = vpack.c.b16 %v478, %v474
        %v583 = vpack.c.b16 %v479, %v475
        %v584 = vpack.c.b16 %v484, %v480
        %v585 = vpack.c.b16 %v485, %v481
        %v586 = vpack.c.b16 %v486, %v482
        %v587 = vpack.c.b16 %v487, %v483
        %v588 = vpack.c.b16 %v492, %v488
        %v589 = vpack.c.b16 %v493, %v489
        %v590 = vpack.c.b16 %v494, %v490
        %v591 = vpack.c.b16 %v495, %v491
        %v592 = vpack.c.b16 %v500, %v496
        %v593 = vpack.c.b16 %v501, %v497
        %v594 = vpack.c.b16 %v502, %v498
        %v595 = vpack.c.b16 %v503, %v499
        %v596 = vpack.c.b16 %v508, %v504
        %v597 = vpack.c.b16 %v509, %v505
        %v598 = vpack.c.b16 %v510, %v506
        %v599 = vpack.c.b16 %v511, %v507
        %v600 = vpack.c.b16 %v516, %v512
        %v601 = vpack.c.b16 %v517, %v513
        %v602 = vpack.c.b16 %v518, %v514
        %v603 = vpack.c.b16 %v519, %v515
        %v604 = vpack.c.b16 %v524, %v520
        %v605 = vpack.c.b16 %v525, %v521
        %v606 = vpack.c.b16 %v526, %v522
        %v607 = vpack.c.b16 %v527, %v523
        %v608 = vpack.c.b16 %v532, %v528
        %v609 = vpack.c.b16 %v533, %v529
        %v610 = vpack.c.b16 %v534, %v530
        %v611 = vpack.c.b16 %v535, %v531
        %v612 = vpack.c.b16 %v540, %v536
        %v613 = vpack.c.b16 %v541, %v537
        %v614 = vpack.c.b16 %v542, %v538
        %v615 = vpack.c.b16 %v543, %v539
        %v616 = vpack.c.b16 %v548, %v544
        %v617 = vpack.c.b16 %v549, %v545
        %v618 = vpack.c.b16 %v550, %v546
        %v619 = vpack.c.b16 %v551, %v547
        %v620 = vpack.c.b16 %v556, %v552
        %v621 = vpack.c.b16 %v557, %v553
        %v622 = vpack.c.b16 %v558, %v554
        %v623 = vpack.c.b16 %v559, %v555
        %688 = vmatprep.subr.bf16.mxu0 %v561
        %689 = vmatpush1.bf16.msra.mxu0 %v560
        %690 = vmatprep.subr.bf16.mxu0 %v565
        %691 = vmatpush1.bf16.msra.mxu0 %v564
        %692 = vmatprep.subr.bf16.mxu0 %v569
        %693 = vmatpush1.bf16.msra.mxu0 %v568
        %694 = vmatprep.subr.bf16.mxu0 %v573
        %695 = vmatpush1.bf16.msra.mxu0 %v572
        %696 = vmatprep.subr.bf16.mxu0 %v577
        %697 = vmatpush1.bf16.msra.mxu0 %v576
        %698 = vmatprep.subr.bf16.mxu0 %v581
        %699 = vmatpush1.bf16.msra.mxu0 %v580
        %700 = vmatprep.subr.bf16.mxu0 %v585
        %701 = vmatpush1.bf16.msra.mxu0 %v584
        %702 = vmatprep.subr.bf16.mxu0 %v589
        %703 = vmatpush1.bf16.msra.mxu0 %v588
        %704 = vmatprep.subr.bf16.mxu0 %v593
        %705 = vmatpush1.bf16.msra.mxu0 %v592
        %706 = vmatprep.subr.bf16.mxu0 %v597
        %707 = vmatpush1.bf16.msra.mxu0 %v596
        %708 = vmatprep.subr.bf16.mxu0 %v601
        %709 = vmatpush1.bf16.msra.mxu0 %v600
        %710 = vmatprep.subr.bf16.mxu0 %v605
        %711 = vmatpush1.bf16.msra.mxu0 %v604
        %712 = vmatprep.subr.bf16.mxu0 %v609
        %713 = vmatpush1.bf16.msra.mxu0 %v608
        %714 = vmatprep.subr.bf16.mxu0 %v613
        %715 = vmatpush1.bf16.msra.mxu0 %v612
        %716 = vmatprep.subr.bf16.mxu0 %v617
        %717 = vmatpush1.bf16.msra.mxu0 %v616
        %718 = vmatprep.subr.bf16.mxu0 %v621
        %719 = vmatpush1.bf16.msra.mxu0 %v620
        %720 = vmatprep.mubr.bf16.mxu0 %v279
        %721 = vmatmul.mubr.bf16.gmra.mrb[0].mxu0 %v278
        %v722 = vpop.f32.mrb[0].mxu0
        %v723 = vadd.f32 0.0, %v722
        %v724 = vpop.f32.mrb[0].mxu0
        %v725 = vadd.f32 0.0, %v724
        %v726 = vpop.f32.mrb[0].mxu0
        %v727 = vadd.f32 0.0, %v726
        %v728 = vpop.f32.mrb[0].mxu0
        %v729 = vadd.f32 0.0, %v728
        %730 = vmatprep.mubr.bf16.mxu0 %v281
        %731 = vmatmul.mubr.bf16.gmra.mrb[0].mxu0 %v280
        %v732 = vpop.f32.mrb[0].mxu0
        %v733 = vadd.f32 0.0, %v732
        %v734 = vpop.f32.mrb[0].mxu0
        %v735 = vadd.f32 0.0, %v734
        %v736 = vpop.f32.mrb[0].mxu0
        %v737 = vadd.f32 0.0, %v736
        %v738 = vpop.f32.mrb[0].mxu0
        %v739 = vadd.f32 0.0, %v738
        %740 = vmatprep.mubr.bf16.mxu0 %v283
        %741 = vmatmul.mubr.bf16.gmra.mrb[0].mxu0 %v282
        %v742 = vpop.f32.mrb[0].mxu0
        %v743 = vadd.f32 0.0, %v742
        %v744 = vpop.f32.mrb[0].mxu0
        %v745 = vadd.f32 0.0, %v744
        %v746 = vpop.f32.mrb[0].mxu0
        %v747 = vadd.f32 0.0, %v746
        %v748 = vpop.f32.mrb[0].mxu0
        %v749 = vadd.f32 0.0, %v748
        %750 = vmatprep.mubr.bf16.mxu0 %v285
        %751 = vmatmul.mubr.bf16.gmra.mrb[0].mxu0 %v284
        %v752 = vpop.f32.mrb[0].mxu0
        %v753 = vadd.f32 0.0, %v752
        %v754 = vpop.f32.mrb[0].mxu0
        %v755 = vadd.f32 0.0, %v754
        %v756 = vpop.f32.mrb[0].mxu0
        %v757 = vadd.f32 0.0, %v756
        %v758 = vpop.f32.mrb[0].mxu0
        %v759 = vadd.f32 0.0, %v758
        %760 = vmatprep.mubr.bf16.mxu0 %v287
        %761 = vmatmul.mubr.bf16.gmra.mrb[0].mxu0 %v286
        %v762 = vpop.f32.mrb[0].mxu0
        %v763 = vadd.f32 0.0, %v762
        %v764 = vpop.f32.mrb[0].mxu0
        %v765 = vadd.f32 0.0, %v764
        %v766 = vpop.f32.mrb[0].mxu0
        %v767 = vadd.f32 0.0, %v766
        %v768 = vpop.f32.mrb[0].mxu0
        %v769 = vadd.f32 0.0, %v768
        %770 = vmatprep.mubr.bf16.mxu0 %v289
        %771 = vmatmul.mubr.bf16.gmra.mrb[0].mxu0 %v288
        %v772 = vpop.f32.mrb[0].mxu0
        %v773 = vadd.f32 0.0, %v772
        %v774 = vpop.f32.mrb[0].mxu0
        %v775 = vadd.f32 0.0, %v774
        %v776 = vpop.f32.mrb[0].mxu0
        %v777 = vadd.f32 0.0, %v776
        %v778 = vpop.f32.mrb[0].mxu0
        %v779 = vadd.f32 0.0, %v778
        %780 = vmatprep.mubr.bf16.mxu0 %v291
        %781 = vmatmul.mubr.bf16.gmra.mrb[0].mxu0 %v290
        %v782 = vpop.f32.mrb[0].mxu0
        %v783 = vadd.f32 0.0, %v782
        %v784 = vpop.f32.mrb[0].mxu0
        %v785 = vadd.f32 0.0, %v784
        %v786 = vpop.f32.mrb[0].mxu0
        %v787 = vadd.f32 0.0, %v786
        %v788 = vpop.f32.mrb[0].mxu0
        %v789 = vadd.f32 0.0, %v788
        %790 = vmatprep.mubr.bf16.mxu0 %v293
        %791 = vmatmul.mubr.bf16.gmra.mrb[0].mxu0 %v292
        %v792 = vpop.f32.mrb[0].mxu0
        %v793 = vadd.f32 0.0, %v792
        %v794 = vpop.f32.mrb[0].mxu0
        %v795 = vadd.f32 0.0, %v794
        %v796 = vpop.f32.mrb[0].mxu0
        %v797 = vadd.f32 0.0, %v796
        %v798 = vpop.f32.mrb[0].mxu0
        %v799 = vadd.f32 0.0, %v798
        %800 = vmatprep.mubr.bf16.mxu0 %v295
        %801 = vmatmul.mubr.bf16.gmra.mrb[0].mxu0 %v294
        %v802 = vpop.f32.mrb[0].mxu0
        %v803 = vadd.f32 0.0, %v802
        %v804 = vpop.f32.mrb[0].mxu0
        %v805 = vadd.f32 0.0, %v804
        %v806 = vpop.f32.mrb[0].mxu0
        %v807 = vadd.f32 0.0, %v806
        %v808 = vpop.f32.mrb[0].mxu0
        %v809 = vadd.f32 0.0, %v808
        %810 = vmatprep.mubr.bf16.mxu0 %v297
        %811 = vmatmul.mubr.bf16.gmra.mrb[0].mxu0 %v296
        %v812 = vpop.f32.mrb[0].mxu0
        %v813 = vadd.f32 0.0, %v812
        %v814 = vpop.f32.mrb[0].mxu0
        %v815 = vadd.f32 0.0, %v814
        %v816 = vpop.f32.mrb[0].mxu0
        %v817 = vadd.f32 0.0, %v816
        %v818 = vpop.f32.mrb[0].mxu0
        %v819 = vadd.f32 0.0, %v818
        %820 = vmatprep.mubr.bf16.mxu0 %v299
        %821 = vmatmul.mubr.bf16.gmra.mrb[0].mxu0 %v298
        %v822 = vpop.f32.mrb[0].mxu0
        %v823 = vadd.f32 0.0, %v822
        %v824 = vpop.f32.mrb[0].mxu0
        %v825 = vadd.f32 0.0, %v824
        %v826 = vpop.f32.mrb[0].mxu0
        %v827 = vadd.f32 0.0, %v826
        %v828 = vpop.f32.mrb[0].mxu0
        %v829 = vadd.f32 0.0, %v828
        %830 = vmatprep.mubr.bf16.mxu0 %v301
        %831 = vmatmul.mubr.bf16.gmra.mrb[0].mxu0 %v300
        %v832 = vpop.f32.mrb[0].mxu0
        %v833 = vadd.f32 0.0, %v832
        %v834 = vpop.f32.mrb[0].mxu0
        %v835 = vadd.f32 0.0, %v834
        %v836 = vpop.f32.mrb[0].mxu0
        %v837 = vadd.f32 0.0, %v836
        %v838 = vpop.f32.mrb[0].mxu0
        %v839 = vadd.f32 0.0, %v838
        %840 = vmatprep.mubr.bf16.mxu0 %v303
        %841 = vmatmul.mubr.bf16.gmra.mrb[0].mxu0 %v302
        %v842 = vpop.f32.mrb[0].mxu0
        %v843 = vadd.f32 0.0, %v842
        %v844 = vpop.f32.mrb[0].mxu0
        %v845 = vadd.f32 0.0, %v844
        %v846 = vpop.f32.mrb[0].mxu0
        %v847 = vpop.f32.mrb[0].mxu0
        %848 = vdwg.mxu0
        %849 = vmatprep.subr.bf16.mxu0 %v563
        %850 = vmatpush1.bf16.msra.mxu0 %v562
        %851 = vmatprep.subr.bf16.mxu0 %v567
        %852 = vmatpush1.bf16.msra.mxu0 %v566
        %853 = vmatprep.subr.bf16.mxu0 %v571
        %854 = vmatpush1.bf16.msra.mxu0 %v570
        %855 = vmatprep.subr.bf16.mxu0 %v575
        %856 = vmatpush1.bf16.msra.mxu0 %v574
        %857 = vmatprep.subr.bf16.mxu0 %v579
        %858 = vmatpush1.bf16.msra.mxu0 %v578
        %859 = vmatprep.subr.bf16.mxu0 %v583
        %860 = vmatpush1.bf16.msra.mxu0 %v582
        %861 = vmatprep.subr.bf16.mxu0 %v587
        %862 = vmatpush1.bf16.msra.mxu0 %v586
        %863 = vmatprep.subr.bf16.mxu0 %v591
        %864 = vmatpush1.bf16.msra.mxu0 %v590
        %865 = vmatprep.subr.bf16.mxu0 %v595
        %866 = vmatpush1.bf16.msra.mxu0 %v594
        %867 = vmatprep.subr.bf16.mxu0 %v599
        %868 = vmatpush1.bf16.msra.mxu0 %v598
        %869 = vmatprep.subr.bf16.mxu0 %v603
        %870 = vmatpush1.bf16.msra.mxu0 %v602
        %871 = vmatprep.subr.bf16.mxu0 %v607
        %872 = vmatpush1.bf16.msra.mxu0 %v606
        %873 = vmatprep.subr.bf16.mxu0 %v611
        %874 = vmatpush1.bf16.msra.mxu0 %v610
        %875 = vmatprep.subr.bf16.mxu0 %v615
        %876 = vmatpush1.bf16.msra.mxu0 %v614
        %877 = vmatprep.subr.bf16.mxu0 %v619
        %878 = vmatpush1.bf16.msra.mxu0 %v618
        %879 = vmatprep.subr.bf16.mxu0 %v623
        %880 = vmatpush1.bf16.msra.mxu0 %v622
        %881 = vmatprep.mubr.bf16.mxu0 %v279
        %882 = vmatmul.mubr.bf16.gmra.mrb[0].mxu0 %v278
        %v883 = vpop.f32.mrb[0].mxu0
        %v884 = vadd.f32 0.0, %v883
        %v885 = vpop.f32.mrb[0].mxu0
        %v886 = vadd.f32 0.0, %v885
        %v887 = vpop.f32.mrb[0].mxu0
        %v888 = vadd.f32 0.0, %v887
        %v889 = vpop.f32.mrb[0].mxu0
        %v890 = vadd.f32 0.0, %v889
        %891 = vmatprep.mubr.bf16.mxu0 %v281
        %892 = vmatmul.mubr.bf16.gmra.mrb[0].mxu0 %v280
        %v893 = vpop.f32.mrb[0].mxu0
        %v894 = vadd.f32 0.0, %v893
        %v895 = vpop.f32.mrb[0].mxu0
        %v896 = vadd.f32 0.0, %v895
        %v897 = vpop.f32.mrb[0].mxu0
        %v898 = vadd.f32 0.0, %v897
        %v899 = vpop.f32.mrb[0].mxu0
        %v900 = vadd.f32 0.0, %v899
        %901 = vmatprep.mubr.bf16.mxu0 %v283
        %902 = vmatmul.mubr.bf16.gmra.mrb[0].mxu0 %v282
        %v903 = vpop.f32.mrb[0].mxu0
        %v904 = vadd.f32 0.0, %v903
        %v905 = vpop.f32.mrb[0].mxu0
        %v906 = vadd.f32 0.0, %v905
        %v907 = vpop.f32.mrb[0].mxu0
        %v908 = vadd.f32 0.0, %v907
        %v909 = vpop.f32.mrb[0].mxu0
        %v910 = vadd.f32 0.0, %v909
        %911 = vmatprep.mubr.bf16.mxu0 %v285
        %912 = vmatmul.mubr.bf16.gmra.mrb[0].mxu0 %v284
        %v913 = vpop.f32.mrb[0].mxu0
        %v914 = vadd.f32 0.0, %v913
        %v915 = vpop.f32.mrb[0].mxu0
        %v916 = vadd.f32 0.0, %v915
        %v917 = vpop.f32.mrb[0].mxu0
        %v918 = vadd.f32 0.0, %v917
        %v919 = vpop.f32.mrb[0].mxu0
        %v920 = vadd.f32 0.0, %v919
        %921 = vmatprep.mubr.bf16.mxu0 %v287
        %922 = vmatmul.mubr.bf16.gmra.mrb[0].mxu0 %v286
        %v923 = vpop.f32.mrb[0].mxu0
        %v924 = vadd.f32 0.0, %v923
        %v925 = vpop.f32.mrb[0].mxu0
        %v926 = vadd.f32 0.0, %v925
        %v927 = vpop.f32.mrb[0].mxu0
        %v928 = vadd.f32 0.0, %v927
        %v929 = vpop.f32.mrb[0].mxu0
        %v930 = vadd.f32 0.0, %v929
        %931 = vmatprep.mubr.bf16.mxu0 %v289
        %932 = vmatmul.mubr.bf16.gmra.mrb[0].mxu0 %v288
        %v933 = vpop.f32.mrb[0].mxu0
        %v934 = vadd.f32 0.0, %v933
        %v935 = vpop.f32.mrb[0].mxu0
        %v936 = vadd.f32 0.0, %v935
        %v937 = vpop.f32.mrb[0].mxu0
        %v938 = vadd.f32 0.0, %v937
        %v939 = vpop.f32.mrb[0].mxu0
        %v940 = vadd.f32 0.0, %v939
        %941 = vmatprep.mubr.bf16.mxu0 %v291
        %942 = vmatmul.mubr.bf16.gmra.mrb[0].mxu0 %v290
        %v943 = vpop.f32.mrb[0].mxu0
        %v944 = vadd.f32 0.0, %v943
        %v945 = vpop.f32.mrb[0].mxu0
        %v946 = vadd.f32 0.0, %v945
        %v947 = vpop.f32.mrb[0].mxu0
        %v948 = vadd.f32 0.0, %v947
        %v949 = vpop.f32.mrb[0].mxu0
        %v950 = vadd.f32 0.0, %v949
        %951 = vmatprep.mubr.bf16.mxu0 %v293
        %952 = vmatmul.mubr.bf16.gmra.mrb[0].mxu0 %v292
        %v953 = vpop.f32.mrb[0].mxu0
        %v954 = vadd.f32 0.0, %v953
        %v955 = vpop.f32.mrb[0].mxu0
        %v956 = vadd.f32 0.0, %v955
        %v957 = vpop.f32.mrb[0].mxu0
        %v958 = vadd.f32 0.0, %v957
        %v959 = vpop.f32.mrb[0].mxu0
        %v960 = vadd.f32 0.0, %v959
        %961 = vmatprep.mubr.bf16.mxu0 %v295
        %962 = vmatmul.mubr.bf16.gmra.mrb[0].mxu0 %v294
        %v963 = vpop.f32.mrb[0].mxu0
        %v964 = vadd.f32 0.0, %v963
        %v965 = vpop.f32.mrb[0].mxu0
        %v966 = vadd.f32 0.0, %v965
        %v967 = vpop.f32.mrb[0].mxu0
        %v968 = vadd.f32 0.0, %v967
        %v969 = vpop.f32.mrb[0].mxu0
        %v970 = vadd.f32 0.0, %v969
        %971 = vmatprep.mubr.bf16.mxu0 %v297
        %972 = vmatmul.mubr.bf16.gmra.mrb[0].mxu0 %v296
        %v973 = vpop.f32.mrb[0].mxu0
        %v974 = vadd.f32 0.0, %v973
        %v975 = vpop.f32.mrb[0].mxu0
        %v976 = vadd.f32 0.0, %v975
        %v977 = vpop.f32.mrb[0].mxu0
        %v978 = vadd.f32 0.0, %v977
        %v979 = vpop.f32.mrb[0].mxu0
        %v980 = vadd.f32 0.0, %v979
        %981 = vmatprep.mubr.bf16.mxu0 %v299
        %982 = vmatmul.mubr.bf16.gmra.mrb[0].mxu0 %v298
        %v983 = vpop.f32.mrb[0].mxu0
        %v984 = vadd.f32 0.0, %v983
        %v985 = vpop.f32.mrb[0].mxu0
        %v986 = vadd.f32 0.0, %v985
        %v987 = vpop.f32.mrb[0].mxu0
        %v988 = vadd.f32 0.0, %v987
        %v989 = vpop.f32.mrb[0].mxu0
        %v990 = vadd.f32 0.0, %v989
        %991 = vmatprep.mubr.bf16.mxu0 %v301
        %992 = vmatmul.mubr.bf16.gmra.mrb[0].mxu0 %v300
        %v993 = vpop.f32.mrb[0].mxu0
        %v994 = vadd.f32 0.0, %v993
        %v995 = vpop.f32.mrb[0].mxu0
        %v996 = vadd.f32 0.0, %v995
        %v997 = vpop.f32.mrb[0].mxu0
        %v998 = vadd.f32 0.0, %v997
        %v999 = vpop.f32.mrb[0].mxu0
        %v1000 = vadd.f32 0.0, %v999
        %1001 = vmatprep.mubr.bf16.mxu0 %v303
        %1002 = vmatmul.mubr.bf16.gmra.mrb[0].mxu0 %v302
        %v1003 = vpop.f32.mrb[0].mxu0
        %v1004 = vadd.f32 0.0, %v1003
        %v1005 = vpop.f32.mrb[0].mxu0
        %v1006 = vadd.f32 0.0, %v1005
        %v1007 = vpop.f32.mrb[0].mxu0
        %v1008 = vpop.f32.mrb[0].mxu0
        %1009 = vdwg.mxu0
        %v1010 = vpack.c.bf16 %v727, %v723
        %v1011 = vpack.c.bf16 %v729, %v725
        %v1012 = vpack.c.bf16 %v888, %v884
        %v1013 = vpack.c.bf16 %v890, %v886
        %v1014 = vpack.c.bf16 %v737, %v733
        %v1015 = vpack.c.bf16 %v739, %v735
        %v1016 = vpack.c.bf16 %v898, %v894
        %v1017 = vpack.c.bf16 %v900, %v896
        %v1018 = vpack.c.bf16 %v747, %v743
        %v1019 = vpack.c.bf16 %v749, %v745
        %v1020 = vpack.c.bf16 %v908, %v904
        %v1021 = vpack.c.bf16 %v910, %v906
        %v1022 = vpack.c.bf16 %v757, %v753
        %v1023 = vpack.c.bf16 %v759, %v755
        %v1024 = vpack.c.bf16 %v918, %v914
        %v1025 = vpack.c.bf16 %v920, %v916
        %v1026 = vpack.c.bf16 %v767, %v763
        %v1027 = vpack.c.bf16 %v769, %v765
        %v1028 = vpack.c.bf16 %v928, %v924
        %v1029 = vpack.c.bf16 %v930, %v926
        %v1030 = vpack.c.bf16 %v777, %v773
        %v1031 = vpack.c.bf16 %v779, %v775
        %v1032 = vpack.c.bf16 %v938, %v934
        %v1033 = vpack.c.bf16 %v940, %v936
        %v1034 = vpack.c.bf16 %v787, %v783
        %v1035 = vpack.c.bf16 %v789, %v785
        %v1036 = vpack.c.bf16 %v948, %v944
        %v1037 = vpack.c.bf16 %v950, %v946
        %v1038 = vpack.c.bf16 %v797, %v793
        %v1039 = vpack.c.bf16 %v799, %v795
        %v1040 = vpack.c.bf16 %v958, %v954
        %v1041 = vpack.c.bf16 %v960, %v956
        %v1042 = vpack.c.bf16 %v807, %v803
        %v1043 = vpack.c.bf16 %v809, %v805
        %v1044 = vpack.c.bf16 %v968, %v964
        %v1045 = vpack.c.bf16 %v970, %v966
        %v1046 = vpack.c.bf16 %v817, %v813
        %v1047 = vpack.c.bf16 %v819, %v815
        %v1048 = vpack.c.bf16 %v978, %v974
        %v1049 = vpack.c.bf16 %v980, %v976
        %v1050 = vpack.c.bf16 %v827, %v823
        %v1051 = vpack.c.bf16 %v829, %v825
        %v1052 = vpack.c.bf16 %v988, %v984
        %v1053 = vpack.c.bf16 %v990, %v986
        %v1054 = vpack.c.bf16 %v837, %v833
        %v1055 = vpack.c.bf16 %v839, %v835
        %v1056 = vpack.c.bf16 %v998, %v994
        %v1057 = vpack.c.bf16 %v1000, %v996
        %v1058 = vpack.c.bf16 %v843, %v843
        %v1059 = vpack.c.bf16 %v845, %v845
        %v1060 = vpack.c.bf16 %v1004, %v1004
        %v1061 = vpack.c.bf16 %v1006, %v1006
        %v1114 = vunpack.c.l.b16 %v1010
        %v1115 = vunpack.c.l.b16 %v1011
        %v1116 = vunpack.c.l.b16 %v1012
        %v1117 = vunpack.c.l.b16 %v1013
        %v1118 = vunpack.c.h.b16 %v1010
        %v1119 = vunpack.c.h.b16 %v1011
        %v1120 = vunpack.c.h.b16 %v1012
        %v1121 = vunpack.c.h.b16 %v1013
        %v1122 = vunpack.c.l.b16 %v1014
        %v1123 = vunpack.c.l.b16 %v1015
        %v1124 = vunpack.c.l.b16 %v1016
        %v1125 = vunpack.c.l.b16 %v1017
        %v1126 = vunpack.c.h.b16 %v1014
        %v1127 = vunpack.c.h.b16 %v1015
        %v1128 = vunpack.c.h.b16 %v1016
        %v1129 = vunpack.c.h.b16 %v1017
        %v1130 = vunpack.c.l.b16 %v1018
        %v1131 = vunpack.c.l.b16 %v1019
        %v1132 = vunpack.c.l.b16 %v1020
        %v1133 = vunpack.c.l.b16 %v1021
        %v1134 = vunpack.c.h.b16 %v1018
        %v1135 = vunpack.c.h.b16 %v1019
        %v1136 = vunpack.c.h.b16 %v1020
        %v1137 = vunpack.c.h.b16 %v1021
        %v1138 = vunpack.c.l.b16 %v1022
        %v1139 = vunpack.c.l.b16 %v1023
        %v1140 = vunpack.c.l.b16 %v1024
        %v1141 = vunpack.c.l.b16 %v1025
        %v1142 = vunpack.c.h.b16 %v1022
        %v1143 = vunpack.c.h.b16 %v1023
        %v1144 = vunpack.c.h.b16 %v1024
        %v1145 = vunpack.c.h.b16 %v1025
        %v1146 = vunpack.c.l.b16 %v1026
        %v1147 = vunpack.c.l.b16 %v1027
        %v1148 = vunpack.c.l.b16 %v1028
        %v1149 = vunpack.c.l.b16 %v1029
        %v1150 = vunpack.c.h.b16 %v1026
        %v1151 = vunpack.c.h.b16 %v1027
        %v1152 = vunpack.c.h.b16 %v1028
        %v1153 = vunpack.c.h.b16 %v1029
        %v1154 = vunpack.c.l.b16 %v1030
        %v1155 = vunpack.c.l.b16 %v1031
        %v1156 = vunpack.c.l.b16 %v1032
        %v1157 = vunpack.c.l.b16 %v1033
        %v1158 = vunpack.c.h.b16 %v1030
        %v1159 = vunpack.c.h.b16 %v1031
        %v1160 = vunpack.c.h.b16 %v1032
        %v1161 = vunpack.c.h.b16 %v1033
        %v1162 = vunpack.c.l.b16 %v1034
        %v1163 = vunpack.c.l.b16 %v1035
        %v1164 = vunpack.c.l.b16 %v1036
        %v1165 = vunpack.c.l.b16 %v1037
        %v1166 = vunpack.c.h.b16 %v1034
        %v1167 = vunpack.c.h.b16 %v1035
        %v1168 = vunpack.c.h.b16 %v1036
        %v1169 = vunpack.c.h.b16 %v1037
        %v1170 = vunpack.c.l.b16 %v1038
        %v1171 = vunpack.c.l.b16 %v1039
        %v1172 = vunpack.c.l.b16 %v1040
        %v1173 = vunpack.c.l.b16 %v1041
        %v1174 = vunpack.c.h.b16 %v1038
        %v1175 = vunpack.c.h.b16 %v1039
        %v1176 = vunpack.c.h.b16 %v1040
        %v1177 = vunpack.c.h.b16 %v1041
        %v1178 = vunpack.c.l.b16 %v1042
        %v1179 = vunpack.c.l.b16 %v1043
        %v1180 = vunpack.c.l.b16 %v1044
        %v1181 = vunpack.c.l.b16 %v1045
        %v1182 = vunpack.c.h.b16 %v1042
        %v1183 = vunpack.c.h.b16 %v1043
        %v1184 = vunpack.c.h.b16 %v1044
        %v1185 = vunpack.c.h.b16 %v1045
        %v1186 = vunpack.c.l.b16 %v1046
        %v1187 = vunpack.c.l.b16 %v1047
        %v1188 = vunpack.c.l.b16 %v1048
        %v1189 = vunpack.c.l.b16 %v1049
        %v1190 = vunpack.c.h.b16 %v1046
        %v1191 = vunpack.c.h.b16 %v1047
        %v1192 = vunpack.c.h.b16 %v1048
        %v1193 = vunpack.c.h.b16 %v1049
        %v1194 = vunpack.c.l.b16 %v1050
        %v1195 = vunpack.c.l.b16 %v1051
        %v1196 = vunpack.c.l.b16 %v1052
        %v1197 = vunpack.c.l.b16 %v1053
        %v1198 = vunpack.c.h.b16 %v1050
        %v1199 = vunpack.c.h.b16 %v1051
        %v1200 = vunpack.c.h.b16 %v1052
        %v1201 = vunpack.c.h.b16 %v1053
        %v1202 = vunpack.c.l.b16 %v1054
        %v1203 = vunpack.c.l.b16 %v1055
        %v1204 = vunpack.c.l.b16 %v1056
        %v1205 = vunpack.c.l.b16 %v1057
        %v1206 = vunpack.c.h.b16 %v1054
        %v1207 = vunpack.c.h.b16 %v1055
        %v1208 = vunpack.c.h.b16 %v1056
        %v1209 = vunpack.c.h.b16 %v1057
        %v1210 = vunpack.c.l.b16 %v1058
        %v1211 = vunpack.c.l.b16 %v1059
        %v1212 = vunpack.c.l.b16 %v1060
        %v1213 = vunpack.c.l.b16 %v1061
        %v1214 = vpack.c.b16 %v1115, %v1114
        %v1215 = vpack.c.b16 %v1117, %v1116
        %v1216 = vpack.c.b16 %v1119, %v1118
        %v1217 = vpack.c.b16 %v1121, %v1120
        %v1218 = vpack.c.b16 %v1123, %v1122
        %v1219 = vpack.c.b16 %v1125, %v1124
        %v1220 = vpack.c.b16 %v1127, %v1126
        %v1221 = vpack.c.b16 %v1129, %v1128
        %v1222 = vpack.c.b16 %v1131, %v1130
        %v1223 = vpack.c.b16 %v1133, %v1132
        %v1224 = vpack.c.b16 %v1135, %v1134
        %v1225 = vpack.c.b16 %v1137, %v1136
        %v1226 = vpack.c.b16 %v1139, %v1138
        %v1227 = vpack.c.b16 %v1141, %v1140
        %v1228 = vpack.c.b16 %v1143, %v1142
        %v1229 = vpack.c.b16 %v1145, %v1144
        %v1230 = vpack.c.b16 %v1147, %v1146
        %v1231 = vpack.c.b16 %v1149, %v1148
        %v1232 = vpack.c.b16 %v1151, %v1150
        %v1233 = vpack.c.b16 %v1153, %v1152
        %v1234 = vpack.c.b16 %v1155, %v1154
        %v1235 = vpack.c.b16 %v1157, %v1156
        %v1236 = vpack.c.b16 %v1159, %v1158
        %v1237 = vpack.c.b16 %v1161, %v1160
        %v1238 = vpack.c.b16 %v1163, %v1162
        %v1239 = vpack.c.b16 %v1165, %v1164
        %v1240 = vpack.c.b16 %v1167, %v1166
        %v1241 = vpack.c.b16 %v1169, %v1168
        %v1242 = vpack.c.b16 %v1171, %v1170
        %v1243 = vpack.c.b16 %v1173, %v1172
        %v1244 = vpack.c.b16 %v1175, %v1174
        %v1245 = vpack.c.b16 %v1177, %v1176
        %v1246 = vpack.c.b16 %v1179, %v1178
        %v1247 = vpack.c.b16 %v1181, %v1180
        %v1248 = vpack.c.b16 %v1183, %v1182
        %v1249 = vpack.c.b16 %v1185, %v1184
        %v1250 = vpack.c.b16 %v1187, %v1186
        %v1251 = vpack.c.b16 %v1189, %v1188
        %v1252 = vpack.c.b16 %v1191, %v1190
        %v1253 = vpack.c.b16 %v1193, %v1192
        %v1254 = vpack.c.b16 %v1195, %v1194
        %v1255 = vpack.c.b16 %v1197, %v1196
        %v1256 = vpack.c.b16 %v1199, %v1198
        %v1257 = vpack.c.b16 %v1201, %v1200
        %v1258 = vpack.c.b16 %v1203, %v1202
        %v1259 = vpack.c.b16 %v1205, %v1204
        %v1260 = vpack.c.b16 %v1207, %v1206
        %v1261 = vpack.c.b16 %v1209, %v1208
        %v1262 = vpack.c.b16 %v1211, %v1210
        %v1263 = vpack.c.b16 %v1213, %v1212
        %1314 = vst [vmem:[#allocation2] sm:$0xff] %v1214
        %1315 = vst [vmem:[#allocation2 + $0x8] sm:$0xff] %v1215
        %1316 = vst [vmem:[#allocation2 + $0x10] sm:$0xff] %v1216
        %1317 = vst [vmem:[#allocation2 + $0x18] sm:$0xff] %v1217
        %1318 = vst [vmem:[#allocation2 + $0x20] sm:$0xff] %v1218
        %1319 = vst [vmem:[#allocation2 + $0x28] sm:$0xff] %v1219
        %1320 = vst [vmem:[#allocation2 + $0x30] sm:$0xff] %v1220
        %1321 = vst [vmem:[#allocation2 + $0x38] sm:$0xff] %v1221
        %1322 = vst [vmem:[#allocation2 + $0x40] sm:$0xff] %v1222
        %1323 = vst [vmem:[#allocation2 + $0x48] sm:$0xff] %v1223
        %1324 = vst [vmem:[#allocation2 + $0x50] sm:$0xff] %v1224
        %1325 = vst [vmem:[#allocation2 + $0x58] sm:$0xff] %v1225
        %1326 = vst [vmem:[#allocation2 + $0x60] sm:$0xff] %v1226
        %1327 = vst [vmem:[#allocation2 + $0x68] sm:$0xff] %v1227
        %1328 = vst [vmem:[#allocation2 + $0x70] sm:$0xff] %v1228
        %1329 = vst [vmem:[#allocation2 + $0x78] sm:$0xff] %v1229
        %1330 = vst [vmem:[#allocation2 + $0x80] sm:$0xff] %v1230
        %1331 = vst [vmem:[#allocation2 + $0x88] sm:$0xff] %v1231
        %1332 = vst [vmem:[#allocation2 + $0x90] sm:$0xff] %v1232
        %1333 = vst [vmem:[#allocation2 + $0x98] sm:$0xff] %v1233
        %1334 = vst [vmem:[#allocation2 + $0xa0] sm:$0xff] %v1234
        %1335 = vst [vmem:[#allocation2 + $0xa8] sm:$0xff] %v1235
        %1336 = vst [vmem:[#allocation2 + $0xb0] sm:$0xff] %v1236
        %1337 = vst [vmem:[#allocation2 + $0xb8] sm:$0xff] %v1237
        %1338 = vst [vmem:[#allocation2 + $0xc0] sm:$0xff] %v1238
        %1339 = vst [vmem:[#allocation2 + $0xc8] sm:$0xff] %v1239
        %1340 = vst [vmem:[#allocation2 + $0xd0] sm:$0xff] %v1240
        %1341 = vst [vmem:[#allocation2 + $0xd8] sm:$0xff] %v1241
        %1342 = vst [vmem:[#allocation2 + $0xe0] sm:$0xff] %v1242
        %1343 = vst [vmem:[#allocation2 + $0xe8] sm:$0xff] %v1243
        %1344 = vst [vmem:[#allocation2 + $0xf0] sm:$0xff] %v1244
        %1345 = vst [vmem:[#allocation2 + $0xf8] sm:$0xff] %v1245
        %1346 = vst [vmem:[#allocation2 + $0x100] sm:$0xff] %v1246
        %1347 = vst [vmem:[#allocation2 + $0x108] sm:$0xff] %v1247
        %1348 = vst [vmem:[#allocation2 + $0x110] sm:$0xff] %v1248
        %1349 = vst [vmem:[#allocation2 + $0x118] sm:$0xff] %v1249
        %1350 = vst [vmem:[#allocation2 + $0x120] sm:$0xff] %v1250
        %1351 = vst [vmem:[#allocation2 + $0x128] sm:$0xff] %v1251
        %1352 = vst [vmem:[#allocation2 + $0x130] sm:$0xff] %v1252
        %1353 = vst [vmem:[#allocation2 + $0x138] sm:$0xff] %v1253
        %1354 = vst [vmem:[#allocation2 + $0x140] sm:$0xff] %v1254
        %1355 = vst [vmem:[#allocation2 + $0x148] sm:$0xff] %v1255
        %1356 = vst [vmem:[#allocation2 + $0x150] sm:$0xff] %v1256
        %1357 = vst [vmem:[#allocation2 + $0x158] sm:$0xff] %v1257
        %1358 = vst [vmem:[#allocation2 + $0x160] sm:$0xff] %v1258
        %1359 = vst [vmem:[#allocation2 + $0x168] sm:$0xff] %v1259
        %1360 = vst [vmem:[#allocation2 + $0x170] sm:$0xff] %v1260
        %1361 = vst [vmem:[#allocation2 + $0x178] sm:$0xff] %v1261
        %1362 = vst [vmem:[#allocation2 + $0x180] sm:$0xff] %v1262
        %1363 = vst [vmem:[#allocation2 + $0x188] sm:$0xff] %v1263
        %v1364 = vld [vmem:[#allocation2] sm:$0xff]
        %v1365 = vld [vmem:[#allocation2 + $0x8] sm:$0xff]
        %v1366 = vld [vmem:[#allocation2 + $0x10] sm:$0xff]
        %v1367 = vld [vmem:[#allocation2 + $0x18] sm:$0xff]
        %v1368 = vld [vmem:[#allocation2 + $0x20] sm:$0xff]
        %v1369 = vld [vmem:[#allocation2 + $0x28] sm:$0xff]
        %v1370 = vld [vmem:[#allocation2 + $0x30] sm:$0xff]
        %v1371 = vld [vmem:[#allocation2 + $0x38] sm:$0xff]
        %v1372 = vld [vmem:[#allocation2 + $0x40] sm:$0xff]
        %v1373 = vld [vmem:[#allocation2 + $0x48] sm:$0xff]
        %v1374 = vld [vmem:[#allocation2 + $0x50] sm:$0xff]
        %v1375 = vld [vmem:[#allocation2 + $0x58] sm:$0xff]
        %v1376 = vld [vmem:[#allocation2 + $0x60] sm:$0xff]
        %v1377 = vld [vmem:[#allocation2 + $0x68] sm:$0xff]
        %v1378 = vld [vmem:[#allocation2 + $0x70] sm:$0xff]
        %v1379 = vld [vmem:[#allocation2 + $0x78] sm:$0xff]
        %v1380 = vld [vmem:[#allocation2 + $0x80] sm:$0xff]
        %v1381 = vld [vmem:[#allocation2 + $0x88] sm:$0xff]
        %v1382 = vld [vmem:[#allocation2 + $0x90] sm:$0xff]
        %v1383 = vld [vmem:[#allocation2 + $0x98] sm:$0xff]
        %v1384 = vld [vmem:[#allocation2 + $0xa0] sm:$0xff]
        %v1385 = vld [vmem:[#allocation2 + $0xa8] sm:$0xff]
        %v1386 = vld [vmem:[#allocation2 + $0xb0] sm:$0xff]
        %v1387 = vld [vmem:[#allocation2 + $0xb8] sm:$0xff]
        %v1388 = vld [vmem:[#allocation2 + $0xc0] sm:$0xff]
        %v1389 = vld [vmem:[#allocation2 + $0xc8] sm:$0xff]
        %v1390 = vld [vmem:[#allocation2 + $0xd0] sm:$0xff]
        %v1391 = vld [vmem:[#allocation2 + $0xd8] sm:$0xff]
        %v1392 = vld [vmem:[#allocation2 + $0xe0] sm:$0xff]
        %v1393 = vld [vmem:[#allocation2 + $0xe8] sm:$0xff]
        %v1394 = vld [vmem:[#allocation2 + $0xf0] sm:$0xff]
        %v1395 = vld [vmem:[#allocation2 + $0xf8] sm:$0xff]
        %v1396 = vld [vmem:[#allocation2 + $0x100] sm:$0xff]
        %v1397 = vld [vmem:[#allocation2 + $0x108] sm:$0xff]
        %v1398 = vld [vmem:[#allocation2 + $0x110] sm:$0xff]
        %v1399 = vld [vmem:[#allocation2 + $0x118] sm:$0xff]
        %v1400 = vld [vmem:[#allocation2 + $0x120] sm:$0xff]
        %v1401 = vld [vmem:[#allocation2 + $0x128] sm:$0xff]
        %v1402 = vld [vmem:[#allocation2 + $0x130] sm:$0xff]
        %v1403 = vld [vmem:[#allocation2 + $0x138] sm:$0xff]
        %v1404 = vld [vmem:[#allocation2 + $0x140] sm:$0xff]
        %v1405 = vld [vmem:[#allocation2 + $0x148] sm:$0xff]
        %v1406 = vld [vmem:[#allocation2 + $0x150] sm:$0xff]
        %v1407 = vld [vmem:[#allocation2 + $0x158] sm:$0xff]
        %v1408 = vld [vmem:[#allocation2 + $0x160] sm:$0xff]
        %v1409 = vld [vmem:[#allocation2 + $0x168] sm:$0xff]
        %v1410 = vld [vmem:[#allocation2 + $0x170] sm:$0xff]
        %v1411 = vld [vmem:[#allocation2 + $0x178] sm:$0xff]
        %v1412 = vld [vmem:[#allocation2 + $0x180] sm:$0xff]
        %v1413 = vld [vmem:[#allocation2 + $0x188] sm:$0xff]
        %v1414 = vld [vmem:[%s2] sm:$0xff]
        %v1415 = vld [vmem:[%s2 + $0x8] sm:$0xff]
        %v1416 = vld [vmem:[%s2 + $0x10] sm:$0xff]
        %v1417 = vld [vmem:[%s2 + $0x18] sm:$0xff]
        %v1418 = vld [vmem:[%s2 + $0x20] sm:$0xff]
        %v1419 = vld [vmem:[%s2 + $0x28] sm:$0xff]
        %v1420 = vld [vmem:[%s2 + $0x30] sm:$0xff]
        %v1421 = vld [vmem:[%s2 + $0x38] sm:$0xff]
        %v1422 = vld [vmem:[%s2 + $0x40] sm:$0xff]
        %v1423 = vld [vmem:[%s2 + $0x48] sm:$0xff]
        %v1424 = vld [vmem:[%s2 + $0x50] sm:$0xff]
        %v1425 = vld [vmem:[%s2 + $0x58] sm:$0xff]
        %v1426 = vld [vmem:[%s2 + $0x60] sm:$0xff]
        %v1427 = vld [vmem:[%s2 + $0x68] sm:$0xff]
        %v1428 = vld [vmem:[%s2 + $0x70] sm:$0xff]
        %v1429 = vld [vmem:[%s2 + $0x78] sm:$0xff]
        %v1430 = vld [vmem:[%s2 + $0x80] sm:$0xff]
        %v1431 = vld [vmem:[%s2 + $0x88] sm:$0xff]
        %v1432 = vld [vmem:[%s2 + $0x90] sm:$0xff]
        %v1433 = vld [vmem:[%s2 + $0x98] sm:$0xff]
        %v1434 = vld [vmem:[%s2 + $0xa0] sm:$0xff]
        %v1435 = vld [vmem:[%s2 + $0xa8] sm:$0xff]
        %v1436 = vld [vmem:[%s2 + $0xb0] sm:$0xff]
        %v1437 = vld [vmem:[%s2 + $0xb8] sm:$0xff]
        %v1438 = vld [vmem:[%s2 + $0xc0] sm:$0xff]
        %v1439 = vld [vmem:[%s2 + $0xc8] sm:$0xff]
        %v1440 = vld [vmem:[%s2 + $0xd0] sm:$0xff]
        %v1441 = vld [vmem:[%s2 + $0xd8] sm:$0xff]
        %v1442 = vld [vmem:[%s2 + $0xe0] sm:$0xff]
        %v1443 = vld [vmem:[%s2 + $0xe8] sm:$0xff]
        %v1444 = vld [vmem:[%s2 + $0xf0] sm:$0xff]
        %v1445 = vld [vmem:[%s2 + $0xf8] sm:$0xff]
        %v1446 = vld [vmem:[%s2 + $0x100] sm:$0xff]
        %v1447 = vld [vmem:[%s2 + $0x108] sm:$0xff]
        %v1448 = vld [vmem:[%s2 + $0x110] sm:$0xff]
        %v1449 = vld [vmem:[%s2 + $0x118] sm:$0xff]
        %v1450 = vld [vmem:[%s2 + $0x120] sm:$0xff]
        %v1451 = vld [vmem:[%s2 + $0x128] sm:$0xff]
        %v1452 = vld [vmem:[%s2 + $0x130] sm:$0xff]
        %v1453 = vld [vmem:[%s2 + $0x138] sm:$0xff]
        %v1454 = vld [vmem:[%s2 + $0x140] sm:$0xff]
        %v1455 = vld [vmem:[%s2 + $0x148] sm:$0xff]
        %v1456 = vld [vmem:[%s2 + $0x150] sm:$0xff]
        %v1457 = vld [vmem:[%s2 + $0x158] sm:$0xff]
        %v1458 = vld [vmem:[%s2 + $0x160] sm:$0xff]
        %v1459 = vld [vmem:[%s2 + $0x168] sm:$0xff]
        %v1460 = vld [vmem:[%s2 + $0x170] sm:$0xff]
        %v1461 = vld [vmem:[%s2 + $0x178] sm:$0xff]
        %v1462 = vld [vmem:[%s2 + $0x180] sm:$0xff]
        %v1463 = vld [vmem:[%s2 + $0x188] sm:$0xff]
        %v1464 = vld [vmem:[%s2 + $0x190] sm:$0xff]
        %v1465 = vld [vmem:[%s2 + $0x198] sm:$0xff]
        %v1466 = vld [vmem:[%s2 + $0x1a0] sm:$0xff]
        %v1467 = vld [vmem:[%s2 + $0x1a8] sm:$0xff]
        %v1468 = vld [vmem:[%s2 + $0x1b0] sm:$0xff]
        %v1469 = vld [vmem:[%s2 + $0x1b8] sm:$0xff]
        %v1470 = vld [vmem:[%s2 + $0x1c0] sm:$0xff]
        %v1471 = vld [vmem:[%s2 + $0x1c8] sm:$0xff]
        %v1472 = vld [vmem:[%s2 + $0x1d0] sm:$0xff]
        %v1473 = vld [vmem:[%s2 + $0x1d8] sm:$0xff]
        %v1474 = vld [vmem:[%s2 + $0x1e0] sm:$0xff]
        %v1475 = vld [vmem:[%s2 + $0x1e8] sm:$0xff]
        %v1476 = vld [vmem:[%s2 + $0x1f0] sm:$0xff]
        %v1477 = vld [vmem:[%s2 + $0x1f8] sm:$0xff]
        %v1478 = vld [vmem:[%s3] sm:$0x3]
        %v1480 = vlaneseq
        %v1481 = vshrl.u32 %v1480, 7
        %v1482 = vsub.s32 0, %v1481
        %v1483 = vrot.slane %v1478, %v1482
        %v1484 = vlaneseq
        %v1485 = vshrl.u32 %v1484, 7
        %v1486 = vsub.s32 1, %v1485
        %v1487 = vrot.slane %v1478, %v1486
        %v1540 = vunpack.c.l.b16 %v1364
        %v1541 = vunpack.c.h.b16 %v1364
        %v1542 = vunpack.c.l.b16 %v1365
        %v1543 = vunpack.c.h.b16 %v1365
        %v1544 = vunpack.c.l.b16 %v1366
        %v1545 = vunpack.c.h.b16 %v1366
        %v1546 = vunpack.c.l.b16 %v1367
        %v1547 = vunpack.c.h.b16 %v1367
        %v1548 = vunpack.c.l.b16 %v1368
        %v1549 = vunpack.c.h.b16 %v1368
        %v1550 = vunpack.c.l.b16 %v1369
        %v1551 = vunpack.c.h.b16 %v1369
        %v1552 = vunpack.c.l.b16 %v1370
        %v1553 = vunpack.c.h.b16 %v1370
        %v1554 = vunpack.c.l.b16 %v1371
        %v1555 = vunpack.c.h.b16 %v1371
        %v1556 = vunpack.c.l.b16 %v1372
        %v1557 = vunpack.c.h.b16 %v1372
        %v1558 = vunpack.c.l.b16 %v1373
        %v1559 = vunpack.c.h.b16 %v1373
        %v1560 = vunpack.c.l.b16 %v1374
        %v1561 = vunpack.c.h.b16 %v1374
        %v1562 = vunpack.c.l.b16 %v1375
        %v1563 = vunpack.c.h.b16 %v1375
        %v1564 = vunpack.c.l.b16 %v1376
        %v1565 = vunpack.c.h.b16 %v1376
        %v1566 = vunpack.c.l.b16 %v1377
        %v1567 = vunpack.c.h.b16 %v1377
        %v1568 = vunpack.c.l.b16 %v1378
        %v1569 = vunpack.c.h.b16 %v1378
        %v1570 = vunpack.c.l.b16 %v1379
        %v1571 = vunpack.c.h.b16 %v1379
        %v1572 = vunpack.c.l.b16 %v1380
        %v1573 = vunpack.c.h.b16 %v1380
        %v1574 = vunpack.c.l.b16 %v1381
        %v1575 = vunpack.c.h.b16 %v1381
        %v1576 = vunpack.c.l.b16 %v1382
        %v1577 = vunpack.c.h.b16 %v1382
        %v1578 = vunpack.c.l.b16 %v1383
        %v1579 = vunpack.c.h.b16 %v1383
        %v1580 = vunpack.c.l.b16 %v1384
        %v1581 = vunpack.c.h.b16 %v1384
        %v1582 = vunpack.c.l.b16 %v1385
        %v1583 = vunpack.c.h.b16 %v1385
        %v1584 = vunpack.c.l.b16 %v1386
        %v1585 = vunpack.c.h.b16 %v1386
        %v1586 = vunpack.c.l.b16 %v1387
        %v1587 = vunpack.c.h.b16 %v1387
        %v1588 = vunpack.c.l.b16 %v1388
        %v1589 = vunpack.c.h.b16 %v1388
        %v1590 = vunpack.c.l.b16 %v1389
        %v1591 = vunpack.c.h.b16 %v1389
        %v1592 = vunpack.c.l.b16 %v1390
        %v1593 = vunpack.c.h.b16 %v1390
        %v1594 = vunpack.c.l.b16 %v1391
        %v1595 = vunpack.c.h.b16 %v1391
        %v1596 = vunpack.c.l.b16 %v1392
        %v1597 = vunpack.c.h.b16 %v1392
        %v1598 = vunpack.c.l.b16 %v1393
        %v1599 = vunpack.c.h.b16 %v1393
        %v1600 = vunpack.c.l.b16 %v1394
        %v1601 = vunpack.c.h.b16 %v1394
        %v1602 = vunpack.c.l.b16 %v1395
        %v1603 = vunpack.c.h.b16 %v1395
        %v1604 = vunpack.c.l.b16 %v1396
        %v1605 = vunpack.c.h.b16 %v1396
        %v1606 = vunpack.c.l.b16 %v1397
        %v1607 = vunpack.c.h.b16 %v1397
        %v1608 = vunpack.c.l.b16 %v1398
        %v1609 = vunpack.c.h.b16 %v1398
        %v1610 = vunpack.c.l.b16 %v1399
        %v1611 = vunpack.c.h.b16 %v1399
        %v1612 = vunpack.c.l.b16 %v1400
        %v1613 = vunpack.c.h.b16 %v1400
        %v1614 = vunpack.c.l.b16 %v1401
        %v1615 = vunpack.c.h.b16 %v1401
        %v1616 = vunpack.c.l.b16 %v1402
        %v1617 = vunpack.c.h.b16 %v1402
        %v1618 = vunpack.c.l.b16 %v1403
        %v1619 = vunpack.c.h.b16 %v1403
        %v1620 = vunpack.c.l.b16 %v1404
        %v1621 = vunpack.c.h.b16 %v1404
        %v1622 = vunpack.c.l.b16 %v1405
        %v1623 = vunpack.c.h.b16 %v1405
        %v1624 = vunpack.c.l.b16 %v1406
        %v1625 = vunpack.c.h.b16 %v1406
        %v1626 = vunpack.c.l.b16 %v1407
        %v1627 = vunpack.c.h.b16 %v1407
        %v1628 = vunpack.c.l.b16 %v1408
        %v1629 = vunpack.c.h.b16 %v1408
        %v1630 = vunpack.c.l.b16 %v1409
        %v1631 = vunpack.c.h.b16 %v1409
        %v1632 = vunpack.c.l.b16 %v1410
        %v1633 = vunpack.c.h.b16 %v1410
        %v1634 = vunpack.c.l.b16 %v1411
        %v1635 = vunpack.c.h.b16 %v1411
        %v1636 = vunpack.c.l.b16 %v1412
        %v1637 = vunpack.c.h.b16 %v1412
        %v1638 = vunpack.c.l.b16 %v1413
        %v1639 = vunpack.c.h.b16 %v1413
        %v1640 = vpack.c.b16 %v1544, %v1540
        %v1641 = vpack.c.b16 %v1545, %v1541
        %v1642 = vpack.c.b16 %v1546, %v1542
        %v1643 = vpack.c.b16 %v1547, %v1543
        %v1644 = vpack.c.b16 %v1552, %v1548
        %v1645 = vpack.c.b16 %v1553, %v1549
        %v1646 = vpack.c.b16 %v1554, %v1550
        %v1647 = vpack.c.b16 %v1555, %v1551
        %v1648 = vpack.c.b16 %v1560, %v1556
        %v1649 = vpack.c.b16 %v1561, %v1557
        %v1650 = vpack.c.b16 %v1562, %v1558
        %v1651 = vpack.c.b16 %v1563, %v1559
        %v1652 = vpack.c.b16 %v1568, %v1564
        %v1653 = vpack.c.b16 %v1569, %v1565
        %v1654 = vpack.c.b16 %v1570, %v1566
        %v1655 = vpack.c.b16 %v1571, %v1567
        %v1656 = vpack.c.b16 %v1576, %v1572
        %v1657 = vpack.c.b16 %v1577, %v1573
        %v1658 = vpack.c.b16 %v1578, %v1574
        %v1659 = vpack.c.b16 %v1579, %v1575
        %v1660 = vpack.c.b16 %v1584, %v1580
        %v1661 = vpack.c.b16 %v1585, %v1581
        %v1662 = vpack.c.b16 %v1586, %v1582
        %v1663 = vpack.c.b16 %v1587, %v1583
        %v1664 = vpack.c.b16 %v1592, %v1588
        %v1665 = vpack.c.b16 %v1593, %v1589
        %v1666 = vpack.c.b16 %v1594, %v1590
        %v1667 = vpack.c.b16 %v1595, %v1591
        %v1668 = vpack.c.b16 %v1600, %v1596
        %v1669 = vpack.c.b16 %v1601, %v1597
        %v1670 = vpack.c.b16 %v1602, %v1598
        %v1671 = vpack.c.b16 %v1603, %v1599
        %v1672 = vpack.c.b16 %v1608, %v1604
        %v1673 = vpack.c.b16 %v1609, %v1605
        %v1674 = vpack.c.b16 %v1610, %v1606
        %v1675 = vpack.c.b16 %v1611, %v1607
        %v1676 = vpack.c.b16 %v1616, %v1612
        %v1677 = vpack.c.b16 %v1617, %v1613
        %v1678 = vpack.c.b16 %v1618, %v1614
        %v1679 = vpack.c.b16 %v1619, %v1615
        %v1680 = vpack.c.b16 %v1624, %v1620
        %v1681 = vpack.c.b16 %v1625, %v1621
        %v1682 = vpack.c.b16 %v1626, %v1622
        %v1683 = vpack.c.b16 %v1627, %v1623
        %v1684 = vpack.c.b16 %v1632, %v1628
        %v1685 = vpack.c.b16 %v1633, %v1629
        %v1686 = vpack.c.b16 %v1634, %v1630
        %v1687 = vpack.c.b16 %v1635, %v1631
        %v1688 = vpack.c.b16 %v1636, %v1636
        %v1689 = vpack.c.b16 %v1637, %v1637
        %v1690 = vpack.c.b16 %v1638, %v1638
        %v1691 = vpack.c.b16 %v1639, %v1639
        %v1808 = vunpack.c.l.b16 %v1414
        %v1809 = vunpack.c.h.b16 %v1414
        %v1810 = vunpack.c.l.b16 %v1415
        %v1811 = vunpack.c.h.b16 %v1415
        %v1812 = vunpack.c.l.b16 %v1416
        %v1813 = vunpack.c.h.b16 %v1416
        %v1814 = vunpack.c.l.b16 %v1417
        %v1815 = vunpack.c.h.b16 %v1417
        %v1816 = vunpack.c.l.b16 %v1418
        %v1817 = vunpack.c.h.b16 %v1418
        %v1818 = vunpack.c.l.b16 %v1419
        %v1819 = vunpack.c.h.b16 %v1419
        %v1820 = vunpack.c.l.b16 %v1420
        %v1821 = vunpack.c.h.b16 %v1420
        %v1822 = vunpack.c.l.b16 %v1421
        %v1823 = vunpack.c.h.b16 %v1421
        %v1824 = vunpack.c.l.b16 %v1422
        %v1825 = vunpack.c.h.b16 %v1422
        %v1826 = vunpack.c.l.b16 %v1423
        %v1827 = vunpack.c.h.b16 %v1423
        %v1828 = vunpack.c.l.b16 %v1424
        %v1829 = vunpack.c.h.b16 %v1424
        %v1830 = vunpack.c.l.b16 %v1425
        %v1831 = vunpack.c.h.b16 %v1425
        %v1832 = vunpack.c.l.b16 %v1426
        %v1833 = vunpack.c.h.b16 %v1426
        %v1834 = vunpack.c.l.b16 %v1427
        %v1835 = vunpack.c.h.b16 %v1427
        %v1836 = vunpack.c.l.b16 %v1428
        %v1837 = vunpack.c.h.b16 %v1428
        %v1838 = vunpack.c.l.b16 %v1429
        %v1839 = vunpack.c.h.b16 %v1429
        %v1840 = vunpack.c.l.b16 %v1430
        %v1841 = vunpack.c.h.b16 %v1430
        %v1842 = vunpack.c.l.b16 %v1431
        %v1843 = vunpack.c.h.b16 %v1431
        %v1844 = vunpack.c.l.b16 %v1432
        %v1845 = vunpack.c.h.b16 %v1432
        %v1846 = vunpack.c.l.b16 %v1433
        %v1847 = vunpack.c.h.b16 %v1433
        %v1848 = vunpack.c.l.b16 %v1434
        %v1849 = vunpack.c.h.b16 %v1434
        %v1850 = vunpack.c.l.b16 %v1435
        %v1851 = vunpack.c.h.b16 %v1435
        %v1852 = vunpack.c.l.b16 %v1436
        %v1853 = vunpack.c.h.b16 %v1436
        %v1854 = vunpack.c.l.b16 %v1437
        %v1855 = vunpack.c.h.b16 %v1437
        %v1856 = vunpack.c.l.b16 %v1438
        %v1857 = vunpack.c.h.b16 %v1438
        %v1858 = vunpack.c.l.b16 %v1439
        %v1859 = vunpack.c.h.b16 %v1439
        %v1860 = vunpack.c.l.b16 %v1440
        %v1861 = vunpack.c.h.b16 %v1440
        %v1862 = vunpack.c.l.b16 %v1441
        %v1863 = vunpack.c.h.b16 %v1441
        %v1864 = vunpack.c.l.b16 %v1442
        %v1865 = vunpack.c.h.b16 %v1442
        %v1866 = vunpack.c.l.b16 %v1443
        %v1867 = vunpack.c.h.b16 %v1443
        %v1868 = vunpack.c.l.b16 %v1444
        %v1869 = vunpack.c.h.b16 %v1444
        %v1870 = vunpack.c.l.b16 %v1445
        %v1871 = vunpack.c.h.b16 %v1445
        %v1872 = vunpack.c.l.b16 %v1446
        %v1873 = vunpack.c.h.b16 %v1446
        %v1874 = vunpack.c.l.b16 %v1447
        %v1875 = vunpack.c.h.b16 %v1447
        %v1876 = vunpack.c.l.b16 %v1448
        %v1877 = vunpack.c.h.b16 %v1448
        %v1878 = vunpack.c.l.b16 %v1449
        %v1879 = vunpack.c.h.b16 %v1449
        %v1880 = vunpack.c.l.b16 %v1450
        %v1881 = vunpack.c.h.b16 %v1450
        %v1882 = vunpack.c.l.b16 %v1451
        %v1883 = vunpack.c.h.b16 %v1451
        %v1884 = vunpack.c.l.b16 %v1452
        %v1885 = vunpack.c.h.b16 %v1452
        %v1886 = vunpack.c.l.b16 %v1453
        %v1887 = vunpack.c.h.b16 %v1453
        %v1888 = vunpack.c.l.b16 %v1454
        %v1889 = vunpack.c.h.b16 %v1454
        %v1890 = vunpack.c.l.b16 %v1455
        %v1891 = vunpack.c.h.b16 %v1455
        %v1892 = vunpack.c.l.b16 %v1456
        %v1893 = vunpack.c.h.b16 %v1456
        %v1894 = vunpack.c.l.b16 %v1457
        %v1895 = vunpack.c.h.b16 %v1457
        %v1896 = vunpack.c.l.b16 %v1458
        %v1897 = vunpack.c.h.b16 %v1458
        %v1898 = vunpack.c.l.b16 %v1459
        %v1899 = vunpack.c.h.b16 %v1459
        %v1900 = vunpack.c.l.b16 %v1460
        %v1901 = vunpack.c.h.b16 %v1460
        %v1902 = vunpack.c.l.b16 %v1461
        %v1903 = vunpack.c.h.b16 %v1461
        %v1904 = vunpack.c.l.b16 %v1462
        %v1905 = vunpack.c.h.b16 %v1462
        %v1906 = vunpack.c.l.b16 %v1463
        %v1907 = vunpack.c.h.b16 %v1463
        %v1908 = vunpack.c.l.b16 %v1464
        %v1909 = vunpack.c.h.b16 %v1464
        %v1910 = vunpack.c.l.b16 %v1465
        %v1911 = vunpack.c.h.b16 %v1465
        %v1912 = vunpack.c.l.b16 %v1466
        %v1913 = vunpack.c.h.b16 %v1466
        %v1914 = vunpack.c.l.b16 %v1467
        %v1915 = vunpack.c.h.b16 %v1467
        %v1916 = vunpack.c.l.b16 %v1468
        %v1917 = vunpack.c.h.b16 %v1468
        %v1918 = vunpack.c.l.b16 %v1469
        %v1919 = vunpack.c.h.b16 %v1469
        %v1920 = vunpack.c.l.b16 %v1470
        %v1921 = vunpack.c.h.b16 %v1470
        %v1922 = vunpack.c.l.b16 %v1471
        %v1923 = vunpack.c.h.b16 %v1471
        %v1924 = vunpack.c.l.b16 %v1472
        %v1925 = vunpack.c.h.b16 %v1472
        %v1926 = vunpack.c.l.b16 %v1473
        %v1927 = vunpack.c.h.b16 %v1473
        %v1928 = vunpack.c.l.b16 %v1474
        %v1929 = vunpack.c.h.b16 %v1474
        %v1930 = vunpack.c.l.b16 %v1475
        %v1931 = vunpack.c.h.b16 %v1475
        %v1932 = vunpack.c.l.b16 %v1476
        %v1933 = vunpack.c.h.b16 %v1476
        %v1934 = vunpack.c.l.b16 %v1477
        %v1935 = vunpack.c.h.b16 %v1477
        %v1936 = vpack.c.b16 %v1810, %v1808
        %v1937 = vpack.c.b16 %v1811, %v1809
        %v1938 = vpack.c.b16 %v1814, %v1812
        %v1939 = vpack.c.b16 %v1815, %v1813
        %v1940 = vpack.c.b16 %v1818, %v1816
        %v1941 = vpack.c.b16 %v1819, %v1817
        %v1942 = vpack.c.b16 %v1822, %v1820
        %v1943 = vpack.c.b16 %v1823, %v1821
        %v1944 = vpack.c.b16 %v1826, %v1824
        %v1945 = vpack.c.b16 %v1827, %v1825
        %v1946 = vpack.c.b16 %v1830, %v1828
        %v1947 = vpack.c.b16 %v1831, %v1829
        %v1948 = vpack.c.b16 %v1834, %v1832
        %v1949 = vpack.c.b16 %v1835, %v1833
        %v1950 = vpack.c.b16 %v1838, %v1836
        %v1951 = vpack.c.b16 %v1839, %v1837
        %v1952 = vpack.c.b16 %v1842, %v1840
        %v1953 = vpack.c.b16 %v1843, %v1841
        %v1954 = vpack.c.b16 %v1846, %v1844
        %v1955 = vpack.c.b16 %v1847, %v1845
        %v1956 = vpack.c.b16 %v1850, %v1848
        %v1957 = vpack.c.b16 %v1851, %v1849
        %v1958 = vpack.c.b16 %v1854, %v1852
        %v1959 = vpack.c.b16 %v1855, %v1853
        %v1960 = vpack.c.b16 %v1858, %v1856
        %v1961 = vpack.c.b16 %v1859, %v1857
        %v1962 = vpack.c.b16 %v1862, %v1860
        %v1963 = vpack.c.b16 %v1863, %v1861
        %v1964 = vpack.c.b16 %v1866, %v1864
        %v1965 = vpack.c.b16 %v1867, %v1865
        %v1966 = vpack.c.b16 %v1870, %v1868
        %v1967 = vpack.c.b16 %v1871, %v1869
        %v1968 = vpack.c.b16 %v1874, %v1872
        %v1969 = vpack.c.b16 %v1875, %v1873
        %v1970 = vpack.c.b16 %v1878, %v1876
        %v1971 = vpack.c.b16 %v1879, %v1877
        %v1972 = vpack.c.b16 %v1882, %v1880
        %v1973 = vpack.c.b16 %v1883, %v1881
        %v1974 = vpack.c.b16 %v1886, %v1884
        %v1975 = vpack.c.b16 %v1887, %v1885
        %v1976 = vpack.c.b16 %v1890, %v1888
        %v1977 = vpack.c.b16 %v1891, %v1889
        %v1978 = vpack.c.b16 %v1894, %v1892
        %v1979 = vpack.c.b16 %v1895, %v1893
        %v1980 = vpack.c.b16 %v1898, %v1896
        %v1981 = vpack.c.b16 %v1899, %v1897
        %v1982 = vpack.c.b16 %v1902, %v1900
        %v1983 = vpack.c.b16 %v1903, %v1901
        %v1984 = vpack.c.b16 %v1906, %v1904
        %v1985 = vpack.c.b16 %v1907, %v1905
        %v1986 = vpack.c.b16 %v1910, %v1908
        %v1987 = vpack.c.b16 %v1911, %v1909
        %v1988 = vpack.c.b16 %v1914, %v1912
        %v1989 = vpack.c.b16 %v1915, %v1913
        %v1990 = vpack.c.b16 %v1918, %v1916
        %v1991 = vpack.c.b16 %v1919, %v1917
        %v1992 = vpack.c.b16 %v1922, %v1920
        %v1993 = vpack.c.b16 %v1923, %v1921
        %v1994 = vpack.c.b16 %v1926, %v1924
        %v1995 = vpack.c.b16 %v1927, %v1925
        %v1996 = vpack.c.b16 %v1930, %v1928
        %v1997 = vpack.c.b16 %v1931, %v1929
        %v1998 = vpack.c.b16 %v1934, %v1932
        %v1999 = vpack.c.b16 %v1935, %v1933
        %2064 = vmatprep.subr.bf16.mxu0 %v1937
        %2065 = vmatpush1.bf16.msra.mxu0 %v1936
        %2066 = vmatprep.subr.bf16.mxu0 %v1939
        %2067 = vmatpush1.bf16.msra.mxu0 %v1938
        %2068 = vmatprep.subr.bf16.mxu0 %v1941
        %2069 = vmatpush1.bf16.msra.mxu0 %v1940
        %2070 = vmatprep.subr.bf16.mxu0 %v1943
        %2071 = vmatpush1.bf16.msra.mxu0 %v1942
        %2072 = vmatprep.subr.bf16.mxu0 %v1945
        %2073 = vmatpush1.bf16.msra.mxu0 %v1944
        %2074 = vmatprep.subr.bf16.mxu0 %v1947
        %2075 = vmatpush1.bf16.msra.mxu0 %v1946
        %2076 = vmatprep.subr.bf16.mxu0 %v1949
        %2077 = vmatpush1.bf16.msra.mxu0 %v1948
        %2078 = vmatprep.subr.bf16.mxu0 %v1951
        %2079 = vmatpush1.bf16.msra.mxu0 %v1950
        %2080 = vmatprep.subr.bf16.mxu0 %v1953
        %2081 = vmatpush1.bf16.msra.mxu0 %v1952
        %2082 = vmatprep.subr.bf16.mxu0 %v1955
        %2083 = vmatpush1.bf16.msra.mxu0 %v1954
        %2084 = vmatprep.subr.bf16.mxu0 %v1957
        %2085 = vmatpush1.bf16.msra.mxu0 %v1956
        %2086 = vmatprep.subr.bf16.mxu0 %v1959
        %2087 = vmatpush1.bf16.msra.mxu0 %v1958
        %2088 = vmatprep.subr.bf16.mxu0 %v1961
        %2089 = vmatpush1.bf16.msra.mxu0 %v1960
        %2090 = vmatprep.subr.bf16.mxu0 %v1963
        %2091 = vmatpush1.bf16.msra.mxu0 %v1962
        %2092 = vmatprep.subr.bf16.mxu0 %v1965
        %2093 = vmatpush1.bf16.msra.mxu0 %v1964
        %2094 = vmatprep.subr.bf16.mxu0 %v1967
        %2095 = vmatpush1.bf16.msra.mxu0 %v1966
        %2096 = vmatprep.mubr.bf16.mxu0 %v1641
        %2097 = vmatmul.mubr.bf16.gmra.mrb[0].mxu0 %v1640
        %v2098 = vpop.f32.mrb[0].mxu0
        %v2099 = vadd.f32 %v1483, %v2098
        %v2100 = vpop.f32.mrb[0].mxu0
        %v2101 = vadd.f32 %v1487, %v2100
        %v2102 = vpop.f32.mrb[0].mxu0
        %v2103 = vadd.f32 %v1483, %v2102
        %v2104 = vpop.f32.mrb[0].mxu0
        %v2105 = vadd.f32 %v1487, %v2104
        %2106 = vmatprep.mubr.bf16.mxu0 %v1645
        %2107 = vmatmul.mubr.bf16.gmra.mrb[0].mxu0 %v1644
        %v2108 = vpop.f32.mrb[0].mxu0
        %v2109 = vadd.f32 %v1483, %v2108
        %v2110 = vpop.f32.mrb[0].mxu0
        %v2111 = vadd.f32 %v1487, %v2110
        %v2112 = vpop.f32.mrb[0].mxu0
        %v2113 = vadd.f32 %v1483, %v2112
        %v2114 = vpop.f32.mrb[0].mxu0
        %v2115 = vadd.f32 %v1487, %v2114
        %2116 = vmatprep.mubr.bf16.mxu0 %v1649
        %2117 = vmatmul.mubr.bf16.gmra.mrb[0].mxu0 %v1648
        %v2118 = vpop.f32.mrb[0].mxu0
        %v2119 = vadd.f32 %v1483, %v2118
        %v2120 = vpop.f32.mrb[0].mxu0
        %v2121 = vadd.f32 %v1487, %v2120
        %v2122 = vpop.f32.mrb[0].mxu0
        %v2123 = vadd.f32 %v1483, %v2122
        %v2124 = vpop.f32.mrb[0].mxu0
        %v2125 = vadd.f32 %v1487, %v2124
        %2126 = vmatprep.mubr.bf16.mxu0 %v1653
        %2127 = vmatmul.mubr.bf16.gmra.mrb[0].mxu0 %v1652
        %v2128 = vpop.f32.mrb[0].mxu0
        %v2129 = vadd.f32 %v1483, %v2128
        %v2130 = vpop.f32.mrb[0].mxu0
        %v2131 = vadd.f32 %v1487, %v2130
        %v2132 = vpop.f32.mrb[0].mxu0
        %v2133 = vadd.f32 %v1483, %v2132
        %v2134 = vpop.f32.mrb[0].mxu0
        %v2135 = vadd.f32 %v1487, %v2134
        %2136 = vmatprep.mubr.bf16.mxu0 %v1657
        %2137 = vmatmul.mubr.bf16.gmra.mrb[0].mxu0 %v1656
        %v2138 = vpop.f32.mrb[0].mxu0
        %v2139 = vadd.f32 %v1483, %v2138
        %v2140 = vpop.f32.mrb[0].mxu0
        %v2141 = vadd.f32 %v1487, %v2140
        %v2142 = vpop.f32.mrb[0].mxu0
        %v2143 = vadd.f32 %v1483, %v2142
        %v2144 = vpop.f32.mrb[0].mxu0
        %v2145 = vadd.f32 %v1487, %v2144
        %2146 = vmatprep.mubr.bf16.mxu0 %v1661
        %2147 = vmatmul.mubr.bf16.gmra.mrb[0].mxu0 %v1660
        %v2148 = vpop.f32.mrb[0].mxu0
        %v2149 = vadd.f32 %v1483, %v2148
        %v2150 = vpop.f32.mrb[0].mxu0
        %v2151 = vadd.f32 %v1487, %v2150
        %v2152 = vpop.f32.mrb[0].mxu0
        %v2153 = vadd.f32 %v1483, %v2152
        %v2154 = vpop.f32.mrb[0].mxu0
        %v2155 = vadd.f32 %v1487, %v2154
        %2156 = vmatprep.mubr.bf16.mxu0 %v1665
        %2157 = vmatmul.mubr.bf16.gmra.mrb[0].mxu0 %v1664
        %v2158 = vpop.f32.mrb[0].mxu0
        %v2159 = vadd.f32 %v1483, %v2158
        %v2160 = vpop.f32.mrb[0].mxu0
        %v2161 = vadd.f32 %v1487, %v2160
        %v2162 = vpop.f32.mrb[0].mxu0
        %v2163 = vadd.f32 %v1483, %v2162
        %v2164 = vpop.f32.mrb[0].mxu0
        %v2165 = vadd.f32 %v1487, %v2164
        %2166 = vmatprep.mubr.bf16.mxu0 %v1669
        %2167 = vmatmul.mubr.bf16.gmra.mrb[0].mxu0 %v1668
        %v2168 = vpop.f32.mrb[0].mxu0
        %v2169 = vadd.f32 %v1483, %v2168
        %v2170 = vpop.f32.mrb[0].mxu0
        %v2171 = vadd.f32 %v1487, %v2170
        %v2172 = vpop.f32.mrb[0].mxu0
        %v2173 = vadd.f32 %v1483, %v2172
        %v2174 = vpop.f32.mrb[0].mxu0
        %v2175 = vadd.f32 %v1487, %v2174
        %2176 = vmatprep.mubr.bf16.mxu0 %v1673
        %2177 = vmatmul.mubr.bf16.gmra.mrb[0].mxu0 %v1672
        %v2178 = vpop.f32.mrb[0].mxu0
        %v2179 = vadd.f32 %v1483, %v2178
        %v2180 = vpop.f32.mrb[0].mxu0
        %v2181 = vadd.f32 %v1487, %v2180
        %v2182 = vpop.f32.mrb[0].mxu0
        %v2183 = vadd.f32 %v1483, %v2182
        %v2184 = vpop.f32.mrb[0].mxu0
        %v2185 = vadd.f32 %v1487, %v2184
        %2186 = vmatprep.mubr.bf16.mxu0 %v1677
        %2187 = vmatmul.mubr.bf16.gmra.mrb[0].mxu0 %v1676
        %v2188 = vpop.f32.mrb[0].mxu0
        %v2189 = vadd.f32 %v1483, %v2188
        %v2190 = vpop.f32.mrb[0].mxu0
        %v2191 = vadd.f32 %v1487, %v2190
        %v2192 = vpop.f32.mrb[0].mxu0
        %v2193 = vadd.f32 %v1483, %v2192
        %v2194 = vpop.f32.mrb[0].mxu0
        %v2195 = vadd.f32 %v1487, %v2194
        %2196 = vmatprep.mubr.bf16.mxu0 %v1681
        %2197 = vmatmul.mubr.bf16.gmra.mrb[0].mxu0 %v1680
        %v2198 = vpop.f32.mrb[0].mxu0
        %v2199 = vadd.f32 %v1483, %v2198
        %v2200 = vpop.f32.mrb[0].mxu0
        %v2201 = vadd.f32 %v1487, %v2200
        %v2202 = vpop.f32.mrb[0].mxu0
        %v2203 = vadd.f32 %v1483, %v2202
        %v2204 = vpop.f32.mrb[0].mxu0
        %v2205 = vadd.f32 %v1487, %v2204
        %2206 = vmatprep.mubr.bf16.mxu0 %v1685
        %2207 = vmatmul.mubr.bf16.gmra.mrb[0].mxu0 %v1684
        %v2208 = vpop.f32.mrb[0].mxu0
        %v2209 = vadd.f32 %v1483, %v2208
        %v2210 = vpop.f32.mrb[0].mxu0
        %v2211 = vadd.f32 %v1487, %v2210
        %v2212 = vpop.f32.mrb[0].mxu0
        %v2213 = vadd.f32 %v1483, %v2212
        %v2214 = vpop.f32.mrb[0].mxu0
        %v2215 = vadd.f32 %v1487, %v2214
        %2216 = vmatprep.mubr.bf16.mxu0 %v1689
        %2217 = vmatmul.mubr.bf16.gmra.mrb[0].mxu0 %v1688
        %v2218 = vpop.f32.mrb[0].mxu0
        %v2219 = vadd.f32 %v1483, %v2218
        %v2220 = vpop.f32.mrb[0].mxu0
        %v2221 = vadd.f32 %v1487, %v2220
        %v2222 = vpop.f32.mrb[0].mxu0
        %v2223 = vpop.f32.mrb[0].mxu0
        %2224 = vdwg.mxu0
        %2225 = vmatprep.subr.bf16.mxu0 %v1969
        %2226 = vmatpush1.bf16.msra.mxu0 %v1968
        %2227 = vmatprep.subr.bf16.mxu0 %v1971
        %2228 = vmatpush1.bf16.msra.mxu0 %v1970
        %2229 = vmatprep.subr.bf16.mxu0 %v1973
        %2230 = vmatpush1.bf16.msra.mxu0 %v1972
        %2231 = vmatprep.subr.bf16.mxu0 %v1975
        %2232 = vmatpush1.bf16.msra.mxu0 %v1974
        %2233 = vmatprep.subr.bf16.mxu0 %v1977
        %2234 = vmatpush1.bf16.msra.mxu0 %v1976
        %2235 = vmatprep.subr.bf16.mxu0 %v1979
        %2236 = vmatpush1.bf16.msra.mxu0 %v1978
        %2237 = vmatprep.subr.bf16.mxu0 %v1981
        %2238 = vmatpush1.bf16.msra.mxu0 %v1980
        %2239 = vmatprep.subr.bf16.mxu0 %v1983
        %2240 = vmatpush1.bf16.msra.mxu0 %v1982
        %2241 = vmatprep.subr.bf16.mxu0 %v1985
        %2242 = vmatpush1.bf16.msra.mxu0 %v1984
        %2243 = vmatprep.subr.bf16.mxu0 %v1987
        %2244 = vmatpush1.bf16.msra.mxu0 %v1986
        %2245 = vmatprep.subr.bf16.mxu0 %v1989
        %2246 = vmatpush1.bf16.msra.mxu0 %v1988
        %2247 = vmatprep.subr.bf16.mxu0 %v1991
        %2248 = vmatpush1.bf16.msra.mxu0 %v1990
        %2249 = vmatprep.subr.bf16.mxu0 %v1993
        %2250 = vmatpush1.bf16.msra.mxu0 %v1992
        %2251 = vmatprep.subr.bf16.mxu0 %v1995
        %2252 = vmatpush1.bf16.msra.mxu0 %v1994
        %2253 = vmatprep.subr.bf16.mxu0 %v1997
        %2254 = vmatpush1.bf16.msra.mxu0 %v1996
        %2255 = vmatprep.subr.bf16.mxu0 %v1999
        %2256 = vmatpush1.bf16.msra.mxu0 %v1998
        %2257 = vmatprep.mubr.bf16.mxu0 %v1643
        %2258 = vmatmul.mubr.bf16.gmra.mrb[0].mxu0 %v1642
        %v2259 = vpop.f32.mrb[0].mxu0
        %v2260 = vadd.f32 %v2099, %v2259
        %v2261 = vpop.f32.mrb[0].mxu0
        %v2262 = vadd.f32 %v2101, %v2261
        %v2263 = vpop.f32.mrb[0].mxu0
        %v2264 = vadd.f32 %v2103, %v2263
        %v2265 = vpop.f32.mrb[0].mxu0
        %v2266 = vadd.f32 %v2105, %v2265
        %2267 = vmatprep.mubr.bf16.mxu0 %v1647
        %2268 = vmatmul.mubr.bf16.gmra.mrb[0].mxu0 %v1646
        %v2269 = vpop.f32.mrb[0].mxu0
        %v2270 = vadd.f32 %v2109, %v2269
        %v2271 = vpop.f32.mrb[0].mxu0
        %v2272 = vadd.f32 %v2111, %v2271
        %v2273 = vpop.f32.mrb[0].mxu0
        %v2274 = vadd.f32 %v2113, %v2273
        %v2275 = vpop.f32.mrb[0].mxu0
        %v2276 = vadd.f32 %v2115, %v2275
        %2277 = vmatprep.mubr.bf16.mxu0 %v1651
        %2278 = vmatmul.mubr.bf16.gmra.mrb[0].mxu0 %v1650
        %v2279 = vpop.f32.mrb[0].mxu0
        %v2280 = vadd.f32 %v2119, %v2279
        %v2281 = vpop.f32.mrb[0].mxu0
        %v2282 = vadd.f32 %v2121, %v2281
        %v2283 = vpop.f32.mrb[0].mxu0
        %v2284 = vadd.f32 %v2123, %v2283
        %v2285 = vpop.f32.mrb[0].mxu0
        %v2286 = vadd.f32 %v2125, %v2285
        %2287 = vmatprep.mubr.bf16.mxu0 %v1655
        %2288 = vmatmul.mubr.bf16.gmra.mrb[0].mxu0 %v1654
        %v2289 = vpop.f32.mrb[0].mxu0
        %v2290 = vadd.f32 %v2129, %v2289
        %v2291 = vpop.f32.mrb[0].mxu0
        %v2292 = vadd.f32 %v2131, %v2291
        %v2293 = vpop.f32.mrb[0].mxu0
        %v2294 = vadd.f32 %v2133, %v2293
        %v2295 = vpop.f32.mrb[0].mxu0
        %v2296 = vadd.f32 %v2135, %v2295
        %2297 = vmatprep.mubr.bf16.mxu0 %v1659
        %2298 = vmatmul.mubr.bf16.gmra.mrb[0].mxu0 %v1658
        %v2299 = vpop.f32.mrb[0].mxu0
        %v2300 = vadd.f32 %v2139, %v2299
        %v2301 = vpop.f32.mrb[0].mxu0
        %v2302 = vadd.f32 %v2141, %v2301
        %v2303 = vpop.f32.mrb[0].mxu0
        %v2304 = vadd.f32 %v2143, %v2303
        %v2305 = vpop.f32.mrb[0].mxu0
        %v2306 = vadd.f32 %v2145, %v2305
        %2307 = vmatprep.mubr.bf16.mxu0 %v1663
        %2308 = vmatmul.mubr.bf16.gmra.mrb[0].mxu0 %v1662
        %v2309 = vpop.f32.mrb[0].mxu0
        %v2310 = vadd.f32 %v2149, %v2309
        %v2311 = vpop.f32.mrb[0].mxu0
        %v2312 = vadd.f32 %v2151, %v2311
        %v2313 = vpop.f32.mrb[0].mxu0
        %v2314 = vadd.f32 %v2153, %v2313
        %v2315 = vpop.f32.mrb[0].mxu0
        %v2316 = vadd.f32 %v2155, %v2315
        %2317 = vmatprep.mubr.bf16.mxu0 %v1667
        %2318 = vmatmul.mubr.bf16.gmra.mrb[0].mxu0 %v1666
        %v2319 = vpop.f32.mrb[0].mxu0
        %v2320 = vadd.f32 %v2159, %v2319
        %v2321 = vpop.f32.mrb[0].mxu0
        %v2322 = vadd.f32 %v2161, %v2321
        %v2323 = vpop.f32.mrb[0].mxu0
        %v2324 = vadd.f32 %v2163, %v2323
        %v2325 = vpop.f32.mrb[0].mxu0
        %v2326 = vadd.f32 %v2165, %v2325
        %2327 = vmatprep.mubr.bf16.mxu0 %v1671
        %2328 = vmatmul.mubr.bf16.gmra.mrb[0].mxu0 %v1670
        %v2329 = vpop.f32.mrb[0].mxu0
        %v2330 = vadd.f32 %v2169, %v2329
        %v2331 = vpop.f32.mrb[0].mxu0
        %v2332 = vadd.f32 %v2171, %v2331
        %v2333 = vpop.f32.mrb[0].mxu0
        %v2334 = vadd.f32 %v2173, %v2333
        %v2335 = vpop.f32.mrb[0].mxu0
        %v2336 = vadd.f32 %v2175, %v2335
        %2337 = vmatprep.mubr.bf16.mxu0 %v1675
        %2338 = vmatmul.mubr.bf16.gmra.mrb[0].mxu0 %v1674
        %v2339 = vpop.f32.mrb[0].mxu0
        %v2340 = vadd.f32 %v2179, %v2339
        %v2341 = vpop.f32.mrb[0].mxu0
        %v2342 = vadd.f32 %v2181, %v2341
        %v2343 = vpop.f32.mrb[0].mxu0
        %v2344 = vadd.f32 %v2183, %v2343
        %v2345 = vpop.f32.mrb[0].mxu0
        %v2346 = vadd.f32 %v2185, %v2345
        %2347 = vmatprep.mubr.bf16.mxu0 %v1679
        %2348 = vmatmul.mubr.bf16.gmra.mrb[0].mxu0 %v1678
        %v2349 = vpop.f32.mrb[0].mxu0
        %v2350 = vadd.f32 %v2189, %v2349
        %v2351 = vpop.f32.mrb[0].mxu0
        %v2352 = vadd.f32 %v2191, %v2351
        %v2353 = vpop.f32.mrb[0].mxu0
        %v2354 = vadd.f32 %v2193, %v2353
        %v2355 = vpop.f32.mrb[0].mxu0
        %v2356 = vadd.f32 %v2195, %v2355
        %2357 = vmatprep.mubr.bf16.mxu0 %v1683
        %2358 = vmatmul.mubr.bf16.gmra.mrb[0].mxu0 %v1682
        %v2359 = vpop.f32.mrb[0].mxu0
        %v2360 = vadd.f32 %v2199, %v2359
        %v2361 = vpop.f32.mrb[0].mxu0
        %v2362 = vadd.f32 %v2201, %v2361
        %v2363 = vpop.f32.mrb[0].mxu0
        %v2364 = vadd.f32 %v2203, %v2363
        %v2365 = vpop.f32.mrb[0].mxu0
        %v2366 = vadd.f32 %v2205, %v2365
        %2367 = vmatprep.mubr.bf16.mxu0 %v1687
        %2368 = vmatmul.mubr.bf16.gmra.mrb[0].mxu0 %v1686
        %v2369 = vpop.f32.mrb[0].mxu0
        %v2370 = vadd.f32 %v2209, %v2369
        %v2371 = vpop.f32.mrb[0].mxu0
        %v2372 = vadd.f32 %v2211, %v2371
        %v2373 = vpop.f32.mrb[0].mxu0
        %v2374 = vadd.f32 %v2213, %v2373
        %v2375 = vpop.f32.mrb[0].mxu0
        %v2376 = vadd.f32 %v2215, %v2375
        %2377 = vmatprep.mubr.bf16.mxu0 %v1691
        %2378 = vmatmul.mubr.bf16.gmra.mrb[0].mxu0 %v1690
        %v2379 = vpop.f32.mrb[0].mxu0
        %v2380 = vadd.f32 %v2219, %v2379
        %v2381 = vpop.f32.mrb[0].mxu0
        %v2382 = vadd.f32 %v2221, %v2381
        %v2383 = vpop.f32.mrb[0].mxu0
        %v2384 = vpop.f32.mrb[0].mxu0
        %2385 = vdwg.mxu0
        %2386 = vst [vmem:[%s204] sm:$0xff] %v2260
        %2387 = vst [vmem:[%s204 + $0x8] sm:$0xff] %v2262
        %2388 = vst [vmem:[%s204 + $0x10] sm:$0xff] %v2264
        %2389 = vst [vmem:[%s204 + $0x18] sm:$0xff] %v2266
        %2390 = vst [vmem:[%s204 + $0x20] sm:$0xff] %v2270
        %2391 = vst [vmem:[%s204 + $0x28] sm:$0xff] %v2272
        %2392 = vst [vmem:[%s204 + $0x30] sm:$0xff] %v2274
        %2393 = vst [vmem:[%s204 + $0x38] sm:$0xff] %v2276
        %2394 = vst [vmem:[%s204 + $0x40] sm:$0xff] %v2280
        %2395 = vst [vmem:[%s204 + $0x48] sm:$0xff] %v2282
        %2396 = vst [vmem:[%s204 + $0x50] sm:$0xff] %v2284
        %2397 = vst [vmem:[%s204 + $0x58] sm:$0xff] %v2286
        %2398 = vst [vmem:[%s204 + $0x60] sm:$0xff] %v2290
        %2399 = vst [vmem:[%s204 + $0x68] sm:$0xff] %v2292
        %2400 = vst [vmem:[%s204 + $0x70] sm:$0xff] %v2294
        %2401 = vst [vmem:[%s204 + $0x78] sm:$0xff] %v2296
        %2402 = vst [vmem:[%s204 + $0x80] sm:$0xff] %v2300
        %2403 = vst [vmem:[%s204 + $0x88] sm:$0xff] %v2302
        %2404 = vst [vmem:[%s204 + $0x90] sm:$0xff] %v2304
        %2405 = vst [vmem:[%s204 + $0x98] sm:$0xff] %v2306
        %2406 = vst [vmem:[%s204 + $0xa0] sm:$0xff] %v2310
        %2407 = vst [vmem:[%s204 + $0xa8] sm:$0xff] %v2312
        %2408 = vst [vmem:[%s204 + $0xb0] sm:$0xff] %v2314
        %2409 = vst [vmem:[%s204 + $0xb8] sm:$0xff] %v2316
        %2410 = vst [vmem:[%s204 + $0xc0] sm:$0xff] %v2320
        %2411 = vst [vmem:[%s204 + $0xc8] sm:$0xff] %v2322
        %2412 = vst [vmem:[%s204 + $0xd0] sm:$0xff] %v2324
        %2413 = vst [vmem:[%s204 + $0xd8] sm:$0xff] %v2326
        %2414 = vst [vmem:[%s204 + $0xe0] sm:$0xff] %v2330
        %2415 = vst [vmem:[%s204 + $0xe8] sm:$0xff] %v2332
        %2416 = vst [vmem:[%s204 + $0xf0] sm:$0xff] %v2334
        %2417 = vst [vmem:[%s204 + $0xf8] sm:$0xff] %v2336
        %2418 = vst [vmem:[%s204 + $0x100] sm:$0xff] %v2340
        %2419 = vst [vmem:[%s204 + $0x108] sm:$0xff] %v2342
        %2420 = vst [vmem:[%s204 + $0x110] sm:$0xff] %v2344
        %2421 = vst [vmem:[%s204 + $0x118] sm:$0xff] %v2346
        %2422 = vst [vmem:[%s204 + $0x120] sm:$0xff] %v2350
        %2423 = vst [vmem:[%s204 + $0x128] sm:$0xff] %v2352
        %2424 = vst [vmem:[%s204 + $0x130] sm:$0xff] %v2354
        %2425 = vst [vmem:[%s204 + $0x138] sm:$0xff] %v2356
        %2426 = vst [vmem:[%s204 + $0x140] sm:$0xff] %v2360
        %2427 = vst [vmem:[%s204 + $0x148] sm:$0xff] %v2362
        %2428 = vst [vmem:[%s204 + $0x150] sm:$0xff] %v2364
        %2429 = vst [vmem:[%s204 + $0x158] sm:$0xff] %v2366
        %2430 = vst [vmem:[%s204 + $0x160] sm:$0xff] %v2370
        %2431 = vst [vmem:[%s204 + $0x168] sm:$0xff] %v2372
        %2432 = vst [vmem:[%s204 + $0x170] sm:$0xff] %v2374
        %2433 = vst [vmem:[%s204 + $0x178] sm:$0xff] %v2376
        %2434 = vst [vmem:[%s204 + $0x180] sm:$0xff] %v2380
        %2435 = vst [vmem:[%s204 + $0x188] sm:$0xff] %v2382
        %s2436 = sand.u32 %s112, 1
        %s2437 = sand.u32 %s112, 1
        %s2438 = smul.addr %s2437, 400
        %s2439 = scalar_lea.vmem [#allocation3], %s2438
        // Predicated region
        $region37: #{focal_modulation_forward.1} parent=35 // pred_check
          %p2440 = pneg %p122
        $region38: #{focal_modulation_forward.1} parent=35 // pred_check_branch
          %2442 = sbr.rel (%p2440) target = $region40
        $region39: #{focal_modulation_forward.1} parent=35 // pred_region
          %s2443 = smul.u32 25, %s15
          %s2444 = ssub.s32 49, %s2443
          %p2445 = scmp.lt.s32.totalorder %s2444, 25
          %s2446 = scalar_select %p2445, %s2444, 25
          %s2447 = smul.u32 128, %s2446
          %s2448 = smul.u32 %s2447, 2
          %p2449 = scmp.ne.s32.totalorder 0, %s2448
          %s2450 = smul.addr %s2443, 2
          %s2451 = smul.addr %s2450, 8
          %s2452 = scalar_lea.vmem %s4, %s2451
          // Predicated region
          $region41: #{focal_modulation_forward.1} parent=39 // pred_check
            %p2453 = pneg %p2449
          $region42: #{focal_modulation_forward.1} parent=39 // pred_check_branch
            %2455 = sbr.rel (%p2453) target = $region44
          $region43: #{focal_modulation_forward.1} parent=39 // pred_region
            // Predicated region
            $region45: #{focal_modulation_forward.1} parent=43 // pred_check
              _
            $region46: #{focal_modulation_forward.1} parent=43 // pred_check_branch
              %2457 = sbr.rel (0) target = $region48
            $region47: #{focal_modulation_forward.1} parent=43 // pred_region
              %s2458 = sdiv.u32.pop %s2446, 25
              %s2459 = srem.u32.pop %s2446, 25
              // While loop
              $region49: #{focal_modulation_forward.1} parent=47 // loop_pre_header
                _
              $region50: #{focal_modulation_forward.1} parent=47 // loop_header
                %s2461 = sphi 0, %s2463
                %p2462 = scmp.ge.s32.totalorder %s2461, %s2458
                %s2466 = sphi 0, %s2571
                %s2467 = sphi %s2439, %s2574
                %s2468 = sphi %s2452, %s2575
              $region51: #{focal_modulation_forward.1} parent=47 // loop_header_branch
                %2465 = sbr.rel (%p2462) target = $region55
              $region52: #{focal_modulation_forward.1} parent=47 // loop_body
                %v2469 = vld [vmem:[%s2467] sm:$0xff]
                %2470 = vst [vmem:[%s2468] sm:$0xff] %v2469
                %v2471 = vld [vmem:[%s2467 + $0x10] sm:$0xff]
                %2472 = vst [vmem:[%s2468 + $0x10] sm:$0xff] %v2471
                %v2473 = vld [vmem:[%s2467 + $0x20] sm:$0xff]
                %2474 = vst [vmem:[%s2468 + $0x20] sm:$0xff] %v2473
                %v2475 = vld [vmem:[%s2467 + $0x30] sm:$0xff]
                %2476 = vst [vmem:[%s2468 + $0x30] sm:$0xff] %v2475
                %v2477 = vld [vmem:[%s2467 + $0x40] sm:$0xff]
                %2478 = vst [vmem:[%s2468 + $0x40] sm:$0xff] %v2477
                %v2479 = vld [vmem:[%s2467 + $0x50] sm:$0xff]
                %2480 = vst [vmem:[%s2468 + $0x50] sm:$0xff] %v2479
                %v2481 = vld [vmem:[%s2467 + $0x60] sm:$0xff]
                %2482 = vst [vmem:[%s2468 + $0x60] sm:$0xff] %v2481
                %v2483 = vld [vmem:[%s2467 + $0x70] sm:$0xff]
                %2484 = vst [vmem:[%s2468 + $0x70] sm:$0xff] %v2483
                %v2485 = vld [vmem:[%s2467 + $0x80] sm:$0xff]
                %2486 = vst [vmem:[%s2468 + $0x80] sm:$0xff] %v2485
                %v2487 = vld [vmem:[%s2467 + $0x90] sm:$0xff]
                %2488 = vst [vmem:[%s2468 + $0x90] sm:$0xff] %v2487
                %v2489 = vld [vmem:[%s2467 + $0xa0] sm:$0xff]
                %2490 = vst [vmem:[%s2468 + $0xa0] sm:$0xff] %v2489
                %v2491 = vld [vmem:[%s2467 + $0xb0] sm:$0xff]
                %2492 = vst [vmem:[%s2468 + $0xb0] sm:$0xff] %v2491
                %v2493 = vld [vmem:[%s2467 + $0xc0] sm:$0xff]
                %2494 = vst [vmem:[%s2468 + $0xc0] sm:$0xff] %v2493
                %v2495 = vld [vmem:[%s2467 + $0xd0] sm:$0xff]
                %2496 = vst [vmem:[%s2468 + $0xd0] sm:$0xff] %v2495
                %v2497 = vld [vmem:[%s2467 + $0xe0] sm:$0xff]
                %2498 = vst [vmem:[%s2468 + $0xe0] sm:$0xff] %v2497
                %v2499 = vld [vmem:[%s2467 + $0xf0] sm:$0xff]
                %2500 = vst [vmem:[%s2468 + $0xf0] sm:$0xff] %v2499
                %v2501 = vld [vmem:[%s2467 + $0x100] sm:$0xff]
                %2502 = vst [vmem:[%s2468 + $0x100] sm:$0xff] %v2501
                %v2503 = vld [vmem:[%s2467 + $0x110] sm:$0xff]
                %2504 = vst [vmem:[%s2468 + $0x110] sm:$0xff] %v2503
                %v2505 = vld [vmem:[%s2467 + $0x120] sm:$0xff]
                %2506 = vst [vmem:[%s2468 + $0x120] sm:$0xff] %v2505
                %v2507 = vld [vmem:[%s2467 + $0x130] sm:$0xff]
                %2508 = vst [vmem:[%s2468 + $0x130] sm:$0xff] %v2507
                %v2509 = vld [vmem:[%s2467 + $0x140] sm:$0xff]
                %2510 = vst [vmem:[%s2468 + $0x140] sm:$0xff] %v2509
                %v2511 = vld [vmem:[%s2467 + $0x150] sm:$0xff]
                %2512 = vst [vmem:[%s2468 + $0x150] sm:$0xff] %v2511
                %v2513 = vld [vmem:[%s2467 + $0x160] sm:$0xff]
                %2514 = vst [vmem:[%s2468 + $0x160] sm:$0xff] %v2513
                %v2515 = vld [vmem:[%s2467 + $0x170] sm:$0xff]
                %2516 = vst [vmem:[%s2468 + $0x170] sm:$0xff] %v2515
                %v2517 = vld [vmem:[%s2467 + $0x180] sm:$0xff]
                %2518 = vst [vmem:[%s2468 + $0x180] sm:$0xff] %v2517
                %v2519 = vld [vmem:[%s2467 + $0x8] sm:$0xff]
                %2520 = vst [vmem:[%s2468 + $0x8] sm:$0xff] %v2519
                %v2521 = vld [vmem:[%s2467 + $0x18] sm:$0xff]
                %2522 = vst [vmem:[%s2468 + $0x18] sm:$0xff] %v2521
                %v2523 = vld [vmem:[%s2467 + $0x28] sm:$0xff]
                %2524 = vst [vmem:[%s2468 + $0x28] sm:$0xff] %v2523
                %v2525 = vld [vmem:[%s2467 + $0x38] sm:$0xff]
                %2526 = vst [vmem:[%s2468 + $0x38] sm:$0xff] %v2525
                %v2527 = vld [vmem:[%s2467 + $0x48] sm:$0xff]
                %2528 = vst [vmem:[%s2468 + $0x48] sm:$0xff] %v2527
                %v2529 = vld [vmem:[%s2467 + $0x58] sm:$0xff]
                %2530 = vst [vmem:[%s2468 + $0x58] sm:$0xff] %v2529
                %v2531 = vld [vmem:[%s2467 + $0x68] sm:$0xff]
                %2532 = vst [vmem:[%s2468 + $0x68] sm:$0xff] %v2531
                %v2533 = vld [vmem:[%s2467 + $0x78] sm:$0xff]
                %2534 = vst [vmem:[%s2468 + $0x78] sm:$0xff] %v2533
                %v2535 = vld [vmem:[%s2467 + $0x88] sm:$0xff]
                %2536 = vst [vmem:[%s2468 + $0x88] sm:$0xff] %v2535
                %v2537 = vld [vmem:[%s2467 + $0x98] sm:$0xff]
                %2538 = vst [vmem:[%s2468 + $0x98] sm:$0xff] %v2537
                %v2539 = vld [vmem:[%s2467 + $0xa8] sm:$0xff]
                %2540 = vst [vmem:[%s2468 + $0xa8] sm:$0xff] %v2539
                %v2541 = vld [vmem:[%s2467 + $0xb8] sm:$0xff]
                %2542 = vst [vmem:[%s2468 + $0xb8] sm:$0xff] %v2541
                %v2543 = vld [vmem:[%s2467 + $0xc8] sm:$0xff]
                %2544 = vst [vmem:[%s2468 + $0xc8] sm:$0xff] %v2543
                %v2545 = vld [vmem:[%s2467 + $0xd8] sm:$0xff]
                %2546 = vst [vmem:[%s2468 + $0xd8] sm:$0xff] %v2545
                %v2547 = vld [vmem:[%s2467 + $0xe8] sm:$0xff]
                %2548 = vst [vmem:[%s2468 + $0xe8] sm:$0xff] %v2547
                %v2549 = vld [vmem:[%s2467 + $0xf8] sm:$0xff]
                %2550 = vst [vmem:[%s2468 + $0xf8] sm:$0xff] %v2549
                %v2551 = vld [vmem:[%s2467 + $0x108] sm:$0xff]
                %2552 = vst [vmem:[%s2468 + $0x108] sm:$0xff] %v2551
                %v2553 = vld [vmem:[%s2467 + $0x118] sm:$0xff]
                %2554 = vst [vmem:[%s2468 + $0x118] sm:$0xff] %v2553
                %v2555 = vld [vmem:[%s2467 + $0x128] sm:$0xff]
                %2556 = vst [vmem:[%s2468 + $0x128] sm:$0xff] %v2555
                %v2557 = vld [vmem:[%s2467 + $0x138] sm:$0xff]
                %2558 = vst [vmem:[%s2468 + $0x138] sm:$0xff] %v2557
                %v2559 = vld [vmem:[%s2467 + $0x148] sm:$0xff]
                %2560 = vst [vmem:[%s2468 + $0x148] sm:$0xff] %v2559
                %v2561 = vld [vmem:[%s2467 + $0x158] sm:$0xff]
                %2562 = vst [vmem:[%s2468 + $0x158] sm:$0xff] %v2561
                %v2563 = vld [vmem:[%s2467 + $0x168] sm:$0xff]
                %2564 = vst [vmem:[%s2468 + $0x168] sm:$0xff] %v2563
                %v2565 = vld [vmem:[%s2467 + $0x178] sm:$0xff]
                %2566 = vst [vmem:[%s2468 + $0x178] sm:$0xff] %v2565
                %v2567 = vld [vmem:[%s2467 + $0x188] sm:$0xff]
                %2568 = vst [vmem:[%s2468 + $0x188] sm:$0xff] %v2567
                %s2569 = sadd.s32 1, %s2466
                %p2570 = scmp.ge.s32.totalorder %s2569, %s2458
                %s2571 = scalar_select %p2570, 0, %s2569
                %s2572 = smul.u32 %s2571, 400
                %s2573 = smul.u32 %s2571, 400
                %s2574 = scalar_lea.vmem %s2439, %s2572 [#allocation3]
                %s2575 = scalar_lea.vmem %s2452, %s2573
              $region53: #{focal_modulation_forward.1} parent=47 // loop_footer
                %s2463 = sadd.s32 %s2461, 1
              $region54: #{focal_modulation_forward.1} parent=47 // loop_footer_branch
                %2460 = sbr.rel target = $region50
              $region55: #{focal_modulation_forward.1} parent=47 // loop_exit
                _
              %s2576 = sdiv.u32.pop %s2446, 25
              %s2577 = srem.u32.pop %s2446, 25
              %s2578 = smul.u32 %s2576, 25
              %s2579 = smul.u32 16, %s2578
              %s2580 = scalar_lea.vmem %s2439, %s2579 [#allocation3]
              %s2581 = smul.u32 16, %s2578
              %s2582 = scalar_lea.vmem %s2452, %s2581
              // While loop
              $region56: #{focal_modulation_forward.1} parent=47 // loop_pre_header
                _
              $region57: #{focal_modulation_forward.1} parent=47 // loop_header
                %s2584 = sphi 0, %s2586
                %p2585 = scmp.ge.s32.totalorder %s2584, %s2577
                %s2589 = sphi 0, %s2598
                %s2590 = sphi %s2580, %s2601
                %s2591 = sphi %s2582, %s2602
              $region58: #{focal_modulation_forward.1} parent=47 // loop_header_branch
                %2588 = sbr.rel (%p2585) target = $region62
              $region59: #{focal_modulation_forward.1} parent=47 // loop_body
                %v2592 = vld [vmem:[%s2590] sm:$0xff]
                %2593 = vst [vmem:[%s2591] sm:$0xff] %v2592
                %v2594 = vld [vmem:[%s2590 + $0x8] sm:$0xff]
                %2595 = vst [vmem:[%s2591 + $0x8] sm:$0xff] %v2594
                %s2596 = sadd.s32 1, %s2589
                %p2597 = scmp.ge.s32.totalorder %s2596, %s2577
                %s2598 = scalar_select %p2597, 0, %s2596
                %s2599 = smul.u32 %s2598, 16
                %s2600 = smul.u32 %s2598, 16
                %s2601 = scalar_lea.vmem %s2580, %s2599 [#allocation3]
                %s2602 = scalar_lea.vmem %s2582, %s2600
              $region60: #{focal_modulation_forward.1} parent=47 // loop_footer
                %s2586 = sadd.s32 %s2584, 1
              $region61: #{focal_modulation_forward.1} parent=47 // loop_footer_branch
                %2583 = sbr.rel target = $region57
              $region62: #{focal_modulation_forward.1} parent=47 // loop_exit
                _
            $region48: #{focal_modulation_forward.1} parent=43 // pred_fallthru
              _
            // Predicated region
            $region63: #{focal_modulation_forward.1} parent=43 // pred_check
              _
            $region64: #{focal_modulation_forward.1} parent=43 // pred_check_branch
              %2604 = sbr.rel target = $region66
            $region65: #{focal_modulation_forward.1} parent=43 // pred_region
              _
            $region66: #{focal_modulation_forward.1} parent=43 // pred_fallthru
              _
          $region44: #{focal_modulation_forward.1} parent=39 // pred_fallthru
            _
          %2605 = vnop
        $region40: #{focal_modulation_forward.1} parent=35 // pred_fallthru
          _
      $region36: #{focal_modulation_forward.1} parent=5 // pred_fallthru
        _
      %p2606 = scmp.le.s32.totalorder 2, %s10
      // Predicated region
      $region67: #{focal_modulation_forward.1} parent=5 // pred_check
        %p2607 = pneg %p2606
      $region68: #{focal_modulation_forward.1} parent=5 // pred_check_branch
        %2609 = sbr.rel (%p2607) target = $region70
      $region69: #{focal_modulation_forward.1} parent=5 // pred_region
        %s2610 = ssub.s32 %s10, 2
        // Predicated region
        $region71: #{focal_modulation_forward.1} parent=69 // pred_check
          %p2611 = pneg %p128
        $region72: #{focal_modulation_forward.1} parent=69 // pred_check_branch
          %2613 = sbr.rel (%p2611) target = $region74
        $region73: #{focal_modulation_forward.1} parent=69 // pred_region
          %s2614 = sand.u32 %s113, 1
          %s2615 = sand.u32 %s113, 1
          %s2616 = smul.addr %s2615, 400
          %s2617 = scalar_lea.vmem [#allocation3], %s2616
        $region74: #{focal_modulation_forward.1} parent=69 // pred_fallthru
          _
      $region70: #{focal_modulation_forward.1} parent=5 // pred_fallthru
        _
    $region6: #{focal_modulation_forward.1} parent=1 // loop_footer
      %s14 = sadd.s32 1, %s10
    $region7: #{focal_modulation_forward.1} parent=1 // loop_footer_branch
      %9 = sbr.rel target = $region3
    $region8: #{focal_modulation_forward.1} parent=1 // loop_exit
      _

</llo_original>
